<compile_context>
chip_gen: v7x
topology: tpu7x:2x2x1
jax: 0.10.0
libtpu: 0.0.40
codegen_flags: <defaults>
</compile_context>

<pallas_src>
import functools

import jax
import jax.numpy as jnp
from jax.experimental import pallas as pl
from jax.experimental.pallas import tpu as pltpu

NEG_SLOPE = 0.2


def _leaky_relu(h):
    return jnp.where(h > 0, h, NEG_SLOPE * h)


def _critic_trunk(x_list, w1_ref, w2_hbm, w3_hbm, w2_buf, w3_buf, sems):
    """Run every x (bf16, (B,1152)) through the 3 Linear->LeakyReLU blocks.

    w1 is already resident in VMEM (auto BlockSpec DMA). w2/w3 live in HBM and are
    pulled into VMEM scratch with async copies that overlap the layer-1 matmul(s).
    Returns a list of f32 (B, 256) activations.
    """
    cp2 = pltpu.make_async_copy(w2_hbm, w2_buf, sems.at[0])
    cp3 = pltpu.make_async_copy(w3_hbm, w3_buf, sems.at[1])
    cp2.start()
    cp3.start()

    # Layer 1: (B,1152) @ (1152,384), bf16 operands, f32 accumulate (MXU).
    w1 = w1_ref[...]
    h1 = [_leaky_relu(jnp.dot(x, w1, preferred_element_type=jnp.float32))
          for x in x_list]

    # Layer 2: (B,384) @ (384,384) — wait for the overlapped w2 DMA just before use.
    cp2.wait()
    w2 = w2_buf[...]
    h2 = [_leaky_relu(jnp.dot(h.astype(jnp.bfloat16), w2,
                              preferred_element_type=jnp.float32))
          for h in h1]

    # Layer 3: (B,384) @ (384,256)
    cp3.wait()
    w3 = w3_buf[...]
    return [_leaky_relu(jnp.dot(h.astype(jnp.bfloat16), w3,
                                preferred_element_type=jnp.float32))
            for h in h2]


def _disc_loss_kernel(s_ref, t_ref, w1_ref, w2_hbm, w3_hbm, w4_ref, o_ref,
                      w2_buf, w3_buf, sems):
    # loss = mean(D(source)) - mean(D(target)); fold the means into the final
    # Linear(256->1):  mean_m(h3 @ w4) == (mean_m h3) @ w4   (exact, layer 4 is linear).
    inv_b = 1.0 / s_ref.shape[0]
    h3s, h3t = _critic_trunk([s_ref[...], t_ref[...]],
                             w1_ref, w2_hbm, w3_hbm, w2_buf, w3_buf, sems)
    pooled = (jnp.sum(h3s, axis=0, keepdims=True)
              - jnp.sum(h3t, axis=0, keepdims=True)) * inv_b              # (1,256) f32
    o_ref[...] = jnp.sum(pooled * w4_ref[...], axis=1, keepdims=True)     # (1,1)  f32


def _gen_loss_kernel(t_ref, w1_ref, w2_hbm, w3_hbm, w4_ref, o_ref,
                     w2_buf, w3_buf, sems):
    # loss = mean(D(target))
    inv_b = 1.0 / t_ref.shape[0]
    (h3t,) = _critic_trunk([t_ref[...]],
                           w1_ref, w2_hbm, w3_hbm, w2_buf, w3_buf, sems)
    pooled = jnp.sum(h3t, axis=0, keepdims=True) * inv_b
    o_ref[...] = jnp.sum(pooled * w4_ref[...], axis=1, keepdims=True)


_VMEM_SPEC = pl.BlockSpec(memory_space=pltpu.MemorySpace.VMEM)
_HBM_SPEC = pl.BlockSpec(memory_space=pl.ANY)


def _scratch_shapes():
    return [
        pltpu.VMEM((384, 384), jnp.bfloat16),   # w2 landing buffer
        pltpu.VMEM((384, 256), jnp.bfloat16),   # w3 landing buffer
        pltpu.SemaphoreType.DMA((2,)),
    ]


def _call_disc(s, t, w1_t, w2_t, w3_t, w4_row):
    return pl.pallas_call(
        _disc_loss_kernel,
        out_shape=jax.ShapeDtypeStruct((1, 1), jnp.float32),
        in_specs=[_VMEM_SPEC, _VMEM_SPEC, _VMEM_SPEC, _HBM_SPEC, _HBM_SPEC, _VMEM_SPEC],
        out_specs=_VMEM_SPEC,
        scratch_shapes=_scratch_shapes(),
    )(s, t, w1_t, w2_t, w3_t, w4_row)


def _call_gen(t, w1_t, w2_t, w3_t, w4_row):
    return pl.pallas_call(
        _gen_loss_kernel,
        out_shape=jax.ShapeDtypeStruct((1, 1), jnp.float32),
        in_specs=[_VMEM_SPEC, _VMEM_SPEC, _HBM_SPEC, _HBM_SPEC, _VMEM_SPEC],
        out_specs=_VMEM_SPEC,
        scratch_shapes=_scratch_shapes(),
    )(t, w1_t, w2_t, w3_t, w4_row)


@functools.partial(jax.jit, static_argnames=("is_discriminator_batch",))
def _forward_impl(params, target_feat, source_feat, is_discriminator_batch):
    w1_t, w2_t, w3_t, w4_row = params
    bs = source_feat.shape[0]
    # Ship activations as bf16: halves the activation DMA and removes an in-kernel cast;
    # the MXU consumes bf16 anyway (matches the f32-accumulate reference recipe).
    s = source_feat.reshape(bs, -1).astype(jnp.bfloat16)
    t = target_feat.reshape(bs, -1).astype(jnp.bfloat16)
    if is_discriminator_batch:
        loss = _call_disc(s, t, w1_t, w2_t, w3_t, w4_row)
    else:
        loss = _call_gen(t, w1_t, w2_t, w3_t, w4_row)
    return loss.reshape(1)


def wgan_cp_forward(params, target_feat, source_feat=None, is_discriminator_batch=True):
    """Mirrors WGAN_CP.forward. params = (w1_t_bf16, w2_t_bf16, w3_t_bf16, w4_row_f32).

    Weights are stored pre-transposed (in, out).  Any batch size B works; stacking more
    (source, target) pairs into B amortizes the per-call weight DMA (dominant cost).
    """
    if source_feat is None:
        # NOTE: mirrors the original PyTorch module verbatim (assert direction and the
        # source_feat = target_feat fallback included), per the "keep forward semantics" rule.
        assert is_discriminator_batch, "source_feat should be given when is_discriminator_batch=True"
        source_feat = target_feat
    return _forward_impl(params, target_feat, source_feat, is_discriminator_batch)


if __name__ == "__main__":
    # Small shapes consistent with the module: channels = 3 * 384 = 1152 input features.
    B = 8
    feat_shape = (B, 3, 384)   # flattened by forward() to (B, 1152)

    key = jax.random.PRNGKey(0)
    k_t, k_s, k1, k2, k3, k4 = jax.random.split(key, 6)

    target_feat = jax.random.normal(k_t, feat_shape, dtype=jnp.float32)
    source_feat = jax.random.normal(k_s, feat_shape, dtype=jnp.float32)

    # nn.Linear-style init U(-1/sqrt(fan_in), 1/sqrt(fan_in)); store transposed (in, out).
    def init_w(k, fan_in, fan_out):
        bound = 1.0 / jnp.sqrt(jnp.float32(fan_in))
        return jax.random.uniform(k, (fan_in, fan_out), jnp.float32, -bound, bound)

    w1_f32 = init_w(k1, 3 * 384, 384)
    w2_f32 = init_w(k2, 384, 384)
    w3_f32 = init_w(k3, 384, 256)
    w4_f32 = init_w(k4, 256, 1)

    params = (
        w1_f32.astype(jnp.bfloat16),   # bf16 weights: MXU-native, half the HBM bytes
        w2_f32.astype(jnp.bfloat16),
        w3_f32.astype(jnp.bfloat16),
        w4_f32.reshape(1, 256),        # tiny last layer kept in f32 as a row vector
    )

    # Run both branches of the forward.
    loss_d = wgan_cp_forward(params, target_feat, source_feat, is_discriminator_batch=True)
    loss_g = wgan_cp_forward(params, target_feat, source_feat, is_discriminator_batch=False)
    loss_d, loss_g = jax.block_until_ready((loss_d, loss_g))

    # Reference in plain JAX with the same precision recipe (bf16 operands, f32 accumulate).
    def disc_ref(x2d):
        h = jnp.dot(x2d.astype(jnp.bfloat16), params[0], preferred_element_type=jnp.float32)
        h = jnp.where(h > 0, h, NEG_SLOPE * h)
        h = jnp.dot(h.astype(jnp.bfloat16), params[1], preferred_element_type=jnp.float32)
        h = jnp.where(h > 0, h, NEG_SLOPE * h)
        h = jnp.dot(h.astype(jnp.bfloat16), params[2], preferred_element_type=jnp.float32)
        h = jnp.where(h > 0, h, NEG_SLOPE * h)
        return jnp.sum(h * params[3], axis=1, keepdims=True)      # (B, 1) f32

    s2 = source_feat.reshape(B, -1)
    t2 = target_feat.reshape(B, -1)
    ref_d = jnp.mean(disc_ref(s2)) - jnp.mean(disc_ref(t2))
    ref_g = jnp.mean(disc_ref(t2))

    assert loss_d.shape == (1,) and loss_g.shape == (1,)
    assert jnp.allclose(loss_d[0], ref_d, atol=2e-3, rtol=2e-2), (loss_d[0], ref_d)
    assert jnp.allclose(loss_g[0], ref_g, atol=2e-3, rtol=2e-2), (loss_g[0], ref_g)

    print("KERNEL_OK")
</pallas_src>

<mosaic_0001>
module attributes {stable_mosaic.version = 11 : i64} {
  func.func @_disc_loss_kernel(%arg0: memref<8x1152xbf16, #tpu.memory_space<vmem>>, %arg1: memref<8x1152xbf16, #tpu.memory_space<vmem>>, %arg2: memref<1152x384xbf16, #tpu.memory_space<vmem>>, %arg3: memref<384x384xbf16, #tpu.memory_space<any>>, %arg4: memref<384x256xbf16, #tpu.memory_space<any>>, %arg5: memref<1x256xf32, #tpu.memory_space<vmem>>, %arg6: memref<1x1xf32, #tpu.memory_space<vmem>>, %arg7: memref<384x384xbf16, #tpu.memory_space<vmem>>, %arg8: memref<384x256xbf16, #tpu.memory_space<vmem>>, %arg9: memref<2x!tpu.dma_semaphore, #tpu.memory_space<semaphore_mem>>) attributes {dimension_semantics = [], scalar_prefetch = 0 : i64, scratch_operands = 3 : i64, tpu.core_type = #tpu.core_type<tc>} {
    %c0 = arith.constant 0 : index
    %c0_0 = arith.constant 0 : index
    %0 = vector.load %arg0[%c0, %c0_0] : memref<8x1152xbf16, #tpu.memory_space<vmem>>, vector<8x1152xbf16>
    %c0_1 = arith.constant 0 : index
    %c0_2 = arith.constant 0 : index
    %1 = vector.load %arg1[%c0_1, %c0_2] : memref<8x1152xbf16, #tpu.memory_space<vmem>>, vector<8x1152xbf16>
    %c0_i32 = arith.constant 0 : i32
    %2 = tpu.memref_slice %arg9[%c0_i32] : memref<2x!tpu.dma_semaphore, #tpu.memory_space<semaphore_mem>> -> memref<1x!tpu.dma_semaphore, #tpu.memory_space<semaphore_mem>>
    %3 = tpu.memref_squeeze %2 : memref<1x!tpu.dma_semaphore, #tpu.memory_space<semaphore_mem>> -> memref<!tpu.dma_semaphore, #tpu.memory_space<semaphore_mem>>
    tpu.enqueue_dma source(%arg3 : memref<384x384xbf16, #tpu.memory_space<any>>) target(%arg7 : memref<384x384xbf16, #tpu.memory_space<vmem>>) target_semaphore(%3 : memref<!tpu.dma_semaphore, #tpu.memory_space<semaphore_mem>>)
    %c1_i32 = arith.constant 1 : i32
    %4 = tpu.memref_slice %arg9[%c1_i32] : memref<2x!tpu.dma_semaphore, #tpu.memory_space<semaphore_mem>> -> memref<1x!tpu.dma_semaphore, #tpu.memory_space<semaphore_mem>>
    %5 = tpu.memref_squeeze %4 : memref<1x!tpu.dma_semaphore, #tpu.memory_space<semaphore_mem>> -> memref<!tpu.dma_semaphore, #tpu.memory_space<semaphore_mem>>
    tpu.enqueue_dma source(%arg4 : memref<384x256xbf16, #tpu.memory_space<any>>) target(%arg8 : memref<384x256xbf16, #tpu.memory_space<vmem>>) target_semaphore(%5 : memref<!tpu.dma_semaphore, #tpu.memory_space<semaphore_mem>>)
    %c0_3 = arith.constant 0 : index
    %c0_4 = arith.constant 0 : index
    %6 = vector.load %arg2[%c0_3, %c0_4] : memref<1152x384xbf16, #tpu.memory_space<vmem>>, vector<1152x384xbf16>
    %cst = arith.constant dense<0.000000e+00> : vector<8x384xf32>
    %7 = tpu.matmul %0, %6, %cst {dimension_numbers = #tpu.dot_dimension_numbers<[1], [0], [0], [1], [0, 0, 1, 1], [], []>} : vector<8x1152xbf16>, vector<1152x384xbf16>, vector<8x384xf32> -> vector<8x384xf32>
    %cst_5 = arith.constant 0.000000e+00 : f32
    %8 = vector.broadcast %cst_5 : f32 to vector<8x384xf32>
    %9 = arith.cmpf ogt, %7, %8 : vector<8x384xf32>
    %cst_6 = arith.constant 2.000000e-01 : f32
    %10 = vector.broadcast %cst_6 : f32 to vector<8x384xf32>
    %11 = arith.mulf %10, %7 : vector<8x384xf32>
    %12 = arith.select %9, %7, %11 : vector<8x384xi1>, vector<8x384xf32>
    %cst_7 = arith.constant dense<0.000000e+00> : vector<8x384xf32>
    %13 = tpu.matmul %1, %6, %cst_7 {dimension_numbers = #tpu.dot_dimension_numbers<[1], [0], [0], [1], [0, 0, 1, 1], [], []>} : vector<8x1152xbf16>, vector<1152x384xbf16>, vector<8x384xf32> -> vector<8x384xf32>
    %cst_8 = arith.constant 0.000000e+00 : f32
    %14 = vector.broadcast %cst_8 : f32 to vector<8x384xf32>
    %15 = arith.cmpf ogt, %13, %14 : vector<8x384xf32>
    %cst_9 = arith.constant 2.000000e-01 : f32
    %16 = vector.broadcast %cst_9 : f32 to vector<8x384xf32>
    %17 = arith.mulf %16, %13 : vector<8x384xf32>
    %18 = arith.select %15, %13, %17 : vector<8x384xi1>, vector<8x384xf32>
    %c0_i32_10 = arith.constant 0 : i32
    %19 = tpu.memref_slice %arg9[%c0_i32_10] : memref<2x!tpu.dma_semaphore, #tpu.memory_space<semaphore_mem>> -> memref<1x!tpu.dma_semaphore, #tpu.memory_space<semaphore_mem>>
    %20 = tpu.memref_squeeze %19 : memref<1x!tpu.dma_semaphore, #tpu.memory_space<semaphore_mem>> -> memref<!tpu.dma_semaphore, #tpu.memory_space<semaphore_mem>>
    tpu.wait_dma2 semaphore(%20 : memref<!tpu.dma_semaphore, #tpu.memory_space<semaphore_mem>>) src(%arg3 : memref<384x384xbf16, #tpu.memory_space<any>>) dst(%arg7 : memref<384x384xbf16, #tpu.memory_space<vmem>>)
    %c0_11 = arith.constant 0 : index
    %c0_12 = arith.constant 0 : index
    %21 = vector.load %arg7[%c0_11, %c0_12] : memref<384x384xbf16, #tpu.memory_space<vmem>>, vector<384x384xbf16>
    %22 = arith.truncf %12 : vector<8x384xf32> to vector<8x384xbf16>
    %cst_13 = arith.constant dense<0.000000e+00> : vector<8x384xf32>
    %23 = tpu.matmul %22, %21, %cst_13 {dimension_numbers = #tpu.dot_dimension_numbers<[1], [0], [0], [1], [0, 0, 1, 1], [], []>} : vector<8x384xbf16>, vector<384x384xbf16>, vector<8x384xf32> -> vector<8x384xf32>
    %cst_14 = arith.constant 0.000000e+00 : f32
    %24 = vector.broadcast %cst_14 : f32 to vector<8x384xf32>
    %25 = arith.cmpf ogt, %23, %24 : vector<8x384xf32>
    %cst_15 = arith.constant 2.000000e-01 : f32
    %26 = vector.broadcast %cst_15 : f32 to vector<8x384xf32>
    %27 = arith.mulf %26, %23 : vector<8x384xf32>
    %28 = arith.select %25, %23, %27 : vector<8x384xi1>, vector<8x384xf32>
    %29 = arith.truncf %18 : vector<8x384xf32> to vector<8x384xbf16>
    %cst_16 = arith.constant dense<0.000000e+00> : vector<8x384xf32>
    %30 = tpu.matmul %29, %21, %cst_16 {dimension_numbers = #tpu.dot_dimension_numbers<[1], [0], [0], [1], [0, 0, 1, 1], [], []>} : vector<8x384xbf16>, vector<384x384xbf16>, vector<8x384xf32> -> vector<8x384xf32>
    %cst_17 = arith.constant 0.000000e+00 : f32
    %31 = vector.broadcast %cst_17 : f32 to vector<8x384xf32>
    %32 = arith.cmpf ogt, %30, %31 : vector<8x384xf32>
    %cst_18 = arith.constant 2.000000e-01 : f32
    %33 = vector.broadcast %cst_18 : f32 to vector<8x384xf32>
    %34 = arith.mulf %33, %30 : vector<8x384xf32>
    %35 = arith.select %32, %30, %34 : vector<8x384xi1>, vector<8x384xf32>
    %c1_i32_19 = arith.constant 1 : i32
    %36 = tpu.memref_slice %arg9[%c1_i32_19] : memref<2x!tpu.dma_semaphore, #tpu.memory_space<semaphore_mem>> -> memref<1x!tpu.dma_semaphore, #tpu.memory_space<semaphore_mem>>
    %37 = tpu.memref_squeeze %36 : memref<1x!tpu.dma_semaphore, #tpu.memory_space<semaphore_mem>> -> memref<!tpu.dma_semaphore, #tpu.memory_space<semaphore_mem>>
    tpu.wait_dma2 semaphore(%37 : memref<!tpu.dma_semaphore, #tpu.memory_space<semaphore_mem>>) src(%arg4 : memref<384x256xbf16, #tpu.memory_space<any>>) dst(%arg8 : memref<384x256xbf16, #tpu.memory_space<vmem>>)
    %c0_20 = arith.constant 0 : index
    %c0_21 = arith.constant 0 : index
    %38 = vector.load %arg8[%c0_20, %c0_21] : memref<384x256xbf16, #tpu.memory_space<vmem>>, vector<384x256xbf16>
    %39 = arith.truncf %28 : vector<8x384xf32> to vector<8x384xbf16>
    %cst_22 = arith.constant dense<0.000000e+00> : vector<8x256xf32>
    %40 = tpu.matmul %39, %38, %cst_22 {dimension_numbers = #tpu.dot_dimension_numbers<[1], [0], [0], [1], [0, 0, 1, 1], [], []>} : vector<8x384xbf16>, vector<384x256xbf16>, vector<8x256xf32> -> vector<8x256xf32>
    %cst_23 = arith.constant 0.000000e+00 : f32
    %41 = vector.broadcast %cst_23 : f32 to vector<8x256xf32>
    %42 = arith.cmpf ogt, %40, %41 : vector<8x256xf32>
    %cst_24 = arith.constant 2.000000e-01 : f32
    %43 = vector.broadcast %cst_24 : f32 to vector<8x256xf32>
    %44 = arith.mulf %43, %40 : vector<8x256xf32>
    %45 = arith.select %42, %40, %44 : vector<8x256xi1>, vector<8x256xf32>
    %46 = arith.truncf %35 : vector<8x384xf32> to vector<8x384xbf16>
    %cst_25 = arith.constant dense<0.000000e+00> : vector<8x256xf32>
    %47 = tpu.matmul %46, %38, %cst_25 {dimension_numbers = #tpu.dot_dimension_numbers<[1], [0], [0], [1], [0, 0, 1, 1], [], []>} : vector<8x384xbf16>, vector<384x256xbf16>, vector<8x256xf32> -> vector<8x256xf32>
    %cst_26 = arith.constant 0.000000e+00 : f32
    %48 = vector.broadcast %cst_26 : f32 to vector<8x256xf32>
    %49 = arith.cmpf ogt, %47, %48 : vector<8x256xf32>
    %cst_27 = arith.constant 2.000000e-01 : f32
    %50 = vector.broadcast %cst_27 : f32 to vector<8x256xf32>
    %51 = arith.mulf %50, %47 : vector<8x256xf32>
    %52 = arith.select %49, %47, %51 : vector<8x256xi1>, vector<8x256xf32>
    %cst_28 = arith.constant dense<0.000000e+00> : vector<256xf32>
    %53 = vector.multi_reduction <add>, %45, %cst_28 [0] : vector<8x256xf32> to vector<256xf32>
    %54 = vector.shape_cast %53 : vector<256xf32> to vector<1x256xf32>
    %cst_29 = arith.constant dense<0.000000e+00> : vector<256xf32>
    %55 = vector.multi_reduction <add>, %52, %cst_29 [0] : vector<8x256xf32> to vector<256xf32>
    %56 = vector.shape_cast %55 : vector<256xf32> to vector<1x256xf32>
    %57 = arith.subf %54, %56 : vector<1x256xf32>
    %cst_30 = arith.constant 1.250000e-01 : f32
    %58 = vector.broadcast %cst_30 : f32 to vector<1x256xf32>
    %59 = arith.mulf %57, %58 : vector<1x256xf32>
    %c0_31 = arith.constant 0 : index
    %c0_32 = arith.constant 0 : index
    %60 = vector.load %arg5[%c0_31, %c0_32] : memref<1x256xf32, #tpu.memory_space<vmem>>, vector<1x256xf32>
    %61 = arith.mulf %59, %60 : vector<1x256xf32>
    %cst_33 = arith.constant dense<0.000000e+00> : vector<1xf32>
    %62 = vector.multi_reduction <add>, %61, %cst_33 [1] : vector<1x256xf32> to vector<1xf32>
    %63 = vector.shape_cast %62 : vector<1xf32> to vector<1x1xf32>
    %c0_34 = arith.constant 0 : index
    %c0_35 = arith.constant 0 : index
    %64 = vector.load %arg6[%c0_34, %c0_35] : memref<1x1xf32, #tpu.memory_space<vmem>>, vector<1x1xf32>
    tpu.vector_store %arg6[%c0_34, %c0_35], %63 {strides = array<i32>} : memref<1x1xf32, #tpu.memory_space<vmem>>, vector<1x1xf32>,
    return
  }
}

</mosaic_0001>

<llo_original>
// kernel: _forward_impl.1
$region0: #{_forward_impl.1}
  #allocation0 [shape = 'u32[]', space=smem, size = 0x4, offset = 0x4, fixed_abs, tag = 'smem constant byte address 0x4 - core index']
  #allocation1 [shape = 'u32[144,128]{1,0:T(1,128)}', space=vmem, size = 0x12000, scoped, tag = 'internal scratch']
  #allocation2 [shape = 'bf16[384,384]{1,0:T(16,128)(2,1)}', space=vmem, size = 0x48000, scoped, tag = 'scratch operand']
  #allocation3 [shape = 'bf16[384,256]{1,0:T(16,128)(2,1)}', space=vmem, size = 0x30000, scoped, tag = 'scratch operand']
  #allocation4 [shape = 's32[2]{0}', space=sflag, size = 0x8, scoped, tag = 'scratch operand']
  #allocation9 [shape = 's32[]', space=sflag, size = 0x4, offset = 0, fixed_abs, tag = 'sflag constant byte address 0x0 - dummy sync flag']
  #allocation11 [shape = 's32[]', space=sflag, size = 0x4, offset = 0, fixed_abs, tag = 'sflag constant byte address 0x0 - dummy sync flag']
  %s0 = inlined_call_operand.vmem [shape: bf16[8,1152], index: 0, kind: input, shape index: {}]
  %s1 = inlined_call_operand.vmem [shape: bf16[8,1152], index: 1, kind: input, shape index: {}]
  %s2 = inlined_call_operand.hbm [shape: bf16[1152,384], index: 2, kind: input, shape index: {}]
  %s3 = inlined_call_operand.hbm [shape: bf16[384,384], index: 3, kind: input, shape index: {}]
  %s4 = inlined_call_operand.hbm [shape: bf16[384,256], index: 4, kind: input, shape index: {}]
  %s5 = inlined_call_operand.vmem [shape: f32[1,256], index: 5, kind: input, shape index: {}]
  %s6 = inlined_call_operand.hbm [shape: f32[1,1], index: 6, kind: output, shape index: {}]
  %s7 = sld [smem:[#allocation0]]
  $region30: #{_forward_impl.1} parent=0
    _
  %s9 = ssub.s32 1, %s7
  %s10 = scalar_select 0, %s9, %s7
  $region1: #{_forward_impl.1} parent=0
    #allocation5 [shape = 'u8[884736]{0}', space=vmem, size = 0xd8000, scoped, tag = 'input window, operand 2, single buffered']
    #allocation6 [shape = 's32[1]{0}', space=sflag, size = 0x4, scoped, tag = 'scoped memory for _forward_impl.1']
    #allocation7 [shape = 's32[1]{0}', space=sflag, size = 0x4, scoped, tag = 'scoped memory for _forward_impl.1']
    #allocation8 [shape = 'u8[512]{0}', space=vmem, size = 0x400, scoped, tag = 'output window, operand 0, single buffered']
    #allocation10 [shape = 'u32[9]{0}', space=smem, size = 0x24, scoped, tag = 'DMA stride descriptor']
    #allocation12 [shape = 'u32[9]{0}', space=smem, size = 0x24, scoped, tag = 'DMA stride descriptor']
    %11 = vsyncpa [#allocation6], 0
    %12 = vsyncpa [#allocation7], 0
    // Predicated region
    $region2: #{_forward_impl.1} parent=1 // pred_check
      _
    $region3: #{_forward_impl.1} parent=1 // pred_check_branch
      %14 = sbr.rel (0) target = $region5
    $region4: #{_forward_impl.1} parent=1 // pred_region
      _
    $region5: #{_forward_impl.1} parent=1 // pred_fallthru
      _
    // Predicated region
    $region6: #{_forward_impl.1} parent=1 // pred_check
      _
    $region7: #{_forward_impl.1} parent=1 // pred_check_branch
      %16 = sbr.rel (0) target = $region9
    $region8: #{_forward_impl.1} parent=1 // pred_region
      _
    $region9: #{_forward_impl.1} parent=1 // pred_fallthru
      _
    // Predicated region
    $region10: #{_forward_impl.1} parent=1 // pred_check
      _
    $region11: #{_forward_impl.1} parent=1 // pred_check_branch
      %18 = sbr.rel (0) target = $region13
    $region12: #{_forward_impl.1} parent=1 // pred_region
      %s20 = ssub.s32 27648, 27648
      %21 = vsyncadd [#allocation6], %s20
      %s22 = sshll.u32 [#allocation5], 4
      %s23 = int_to_ptr.vmem [resolvable:$true] %s22
      %28 = dma.hbm_to_vmem [thread:$0]  %s2, 27648, %s23, [#allocation6], 192, 192, 12
    $region13: #{_forward_impl.1} parent=1 // pred_fallthru
      _
    // Predicated region
    $region14: #{_forward_impl.1} parent=1 // pred_check
      _
    $region15: #{_forward_impl.1} parent=1 // pred_check_branch
      %30 = sbr.rel (0) target = $region17
    $region16: #{_forward_impl.1} parent=1 // pred_region
      _
    $region17: #{_forward_impl.1} parent=1 // pred_fallthru
      _
    // Predicated region
    $region18: #{_forward_impl.1} parent=1 // pred_check
      _
    $region19: #{_forward_impl.1} parent=1 // pred_check_branch
      %32 = sbr.rel (0) target = $region21
    $region20: #{_forward_impl.1} parent=1 // pred_region
      %33 = dma.done [#allocation6], 27648
    $region21: #{_forward_impl.1} parent=1 // pred_fallthru
      _
    %v35 = vld [vmem:[%s0] sm:$0xff]
    %v36 = vld [vmem:[%s0 + $0x8] sm:$0xff]
    %v37 = vld [vmem:[%s0 + $0x10] sm:$0xff]
    %v38 = vld [vmem:[%s0 + $0x18] sm:$0xff]
    %v39 = vld [vmem:[%s0 + $0x20] sm:$0xf]
    %v40 = vld [vmem:[%s1] sm:$0xff]
    %v41 = vld [vmem:[%s1 + $0x8] sm:$0xff]
    %v42 = vld [vmem:[%s1 + $0x10] sm:$0xff]
    %v43 = vld [vmem:[%s1 + $0x18] sm:$0xff]
    %v44 = vld [vmem:[%s1 + $0x20] sm:$0xf]
    %s46 = sshll.u32 1, 14
    %s47 = sxor.u32 4294967295, %s46
    %s49 = sld [smem:[#allocation0]]
    %s50 = sadd.s32 2, %s49
    %s52 = sshll.u32 7, 26
    %s53 = sxor.u32 4294967295, %s52
    %s54 = sand.u32 0, %s53
    %s55 = sshll.u32 %s50, 26
    %s56 = sor.u32 %s54, %s55
    %s57 = sshll.u32 [#allocation2], 4
    %s58 = int_to_ptr.vmem [resolvable:$true] %s57
    %61 = sst [smem:[#allocation10]] 384
    %s62 = scalar_lea.smem [#allocation10], 1
    %63 = sst [smem:[%s62]] 384
    %s64 = scalar_lea.smem [#allocation10], 2
    %65 = sst [smem:[%s64]] 3
    %s66 = scalar_lea.smem [#allocation10], 3
    %67 = sst [smem:[%s66]] 64
    %s68 = scalar_lea.smem [#allocation10], 4
    %69 = sst [smem:[%s68]] 128
    %s70 = scalar_lea.smem [#allocation10], 5
    %71 = sst [smem:[%s70]] 2
    %s72 = scalar_lea.smem [#allocation10], 6
    %73 = sst [smem:[%s72]] 192
    %s74 = scalar_lea.smem [#allocation10], 7
    %75 = sst [smem:[%s74]] 64
    %s76 = scalar_lea.smem [#allocation10], 8
    %77 = sst [smem:[%s76]] 4
    %79 = dma.general %s3, 9216, %s58, [#allocation4], [#allocation9], [#allocation10], %s56, 0
    %s80 = scalar_lea.sflag [#allocation4], 1
    %s82 = sshll.u32 1, 14
    %s83 = sxor.u32 4294967295, %s82
    %s85 = sadd.s32 2, %s49
    %s87 = sshll.u32 7, 26
    %s88 = sxor.u32 4294967295, %s87
    %s89 = sand.u32 0, %s88
    %s90 = sshll.u32 %s85, 26
    %s91 = sor.u32 %s89, %s90
    %s92 = sshll.u32 [#allocation3], 4
    %s93 = int_to_ptr.vmem [resolvable:$true] %s92
    %96 = sst [smem:[#allocation12]] 256
    %s97 = scalar_lea.smem [#allocation12], 1
    %98 = sst [smem:[%s97]] 256
    %s99 = scalar_lea.smem [#allocation12], 2
    %100 = sst [smem:[%s99]] 2
    %s101 = scalar_lea.smem [#allocation12], 3
    %102 = sst [smem:[%s101]] 64
    %s103 = scalar_lea.smem [#allocation12], 4
    %104 = sst [smem:[%s103]] 128
    %s105 = scalar_lea.smem [#allocation12], 5
    %106 = sst [smem:[%s105]] 2
    %s107 = scalar_lea.smem [#allocation12], 6
    %108 = sst [smem:[%s107]] 128
    %s109 = scalar_lea.smem [#allocation12], 7
    %110 = sst [smem:[%s109]] 64
    %s111 = scalar_lea.smem [#allocation12], 8
    %112 = sst [smem:[%s111]] 4
    %114 = dma.general %s4, 6144, %s93, %s80, [#allocation11], [#allocation12], %s91, 0
    %v115 = vld [vmem:[#allocation5] sm:$0xff]
    %v116 = vld [vmem:[#allocation5 + $0x8] sm:$0xf]
    %v117 = vld [vmem:[#allocation5 + $0xc] sm:$0xff]
    %v118 = vld [vmem:[#allocation5 + $0x14] sm:$0xf]
    %v119 = vld [vmem:[#allocation5 + $0x18] sm:$0xff]
    %v120 = vld [vmem:[#allocation5 + $0x20] sm:$0xf]
    %v121 = vld [vmem:[#allocation5 + $0x24] sm:$0xff]
    %v122 = vld [vmem:[#allocation5 + $0x2c] sm:$0xf]
    %v123 = vld [vmem:[#allocation5 + $0x30] sm:$0xff]
    %v124 = vld [vmem:[#allocation5 + $0x38] sm:$0xf]
    %v125 = vld [vmem:[#allocation5 + $0x3c] sm:$0xff]
    %v126 = vld [vmem:[#allocation5 + $0x44] sm:$0xf]
    %v127 = vld [vmem:[#allocation5 + $0x48] sm:$0xff]
    %v128 = vld [vmem:[#allocation5 + $0x50] sm:$0xf]
    %v129 = vld [vmem:[#allocation5 + $0x54] sm:$0xff]
    %v130 = vld [vmem:[#allocation5 + $0x5c] sm:$0xf]
    %v131 = vld [vmem:[#allocation5 + $0x60] sm:$0xff]
    %v132 = vld [vmem:[#allocation5 + $0x68] sm:$0xf]
    %v133 = vld [vmem:[#allocation5 + $0x6c] sm:$0xff]
    %v134 = vld [vmem:[#allocation5 + $0x74] sm:$0xf]
    %v135 = vld [vmem:[#allocation5 + $0x78] sm:$0xff]
    %v136 = vld [vmem:[#allocation5 + $0x80] sm:$0xf]
    %v137 = vld [vmem:[#allocation5 + $0x84] sm:$0xff]
    %v138 = vld [vmem:[#allocation5 + $0x8c] sm:$0xf]
    %v139 = vld [vmem:[#allocation5 + $0x90] sm:$0xff]
    %v140 = vld [vmem:[#allocation5 + $0x98] sm:$0xf]
    %v141 = vld [vmem:[#allocation5 + $0x9c] sm:$0xff]
    %v142 = vld [vmem:[#allocation5 + $0xa4] sm:$0xf]
    %v143 = vld [vmem:[#allocation5 + $0xa8] sm:$0xff]
    %v144 = vld [vmem:[#allocation5 + $0xb0] sm:$0xf]
    %v145 = vld [vmem:[#allocation5 + $0xb4] sm:$0xff]
    %v146 = vld [vmem:[#allocation5 + $0xbc] sm:$0xf]
    %v147 = vld [vmem:[#allocation5 + $0xc0] sm:$0xff]
    %v148 = vld [vmem:[#allocation5 + $0xc8] sm:$0xf]
    %v149 = vld [vmem:[#allocation5 + $0xcc] sm:$0xff]
    %v150 = vld [vmem:[#allocation5 + $0xd4] sm:$0xf]
    %v151 = vld [vmem:[#allocation5 + $0xd8] sm:$0xff]
    %v152 = vld [vmem:[#allocation5 + $0xe0] sm:$0xf]
    %v153 = vld [vmem:[#allocation5 + $0xe4] sm:$0xff]
    %v154 = vld [vmem:[#allocation5 + $0xec] sm:$0xf]
    %v155 = vld [vmem:[#allocation5 + $0xf0] sm:$0xff]
    %v156 = vld [vmem:[#allocation5 + $0xf8] sm:$0xf]
    %v157 = vld [vmem:[#allocation5 + $0xfc] sm:$0xff]
    %v158 = vld [vmem:[#allocation5 + $0x104] sm:$0xf]
    %v159 = vld [vmem:[#allocation5 + $0x108] sm:$0xff]
    %v160 = vld [vmem:[#allocation5 + $0x110] sm:$0xf]
    %v161 = vld [vmem:[#allocation5 + $0x114] sm:$0xff]
    %v162 = vld [vmem:[#allocation5 + $0x11c] sm:$0xf]
    %v163 = vld [vmem:[#allocation5 + $0x120] sm:$0xff]
    %v164 = vld [vmem:[#allocation5 + $0x128] sm:$0xf]
    %v165 = vld [vmem:[#allocation5 + $0x12c] sm:$0xff]
    %v166 = vld [vmem:[#allocation5 + $0x134] sm:$0xf]
    %v167 = vld [vmem:[#allocation5 + $0x138] sm:$0xff]
    %v168 = vld [vmem:[#allocation5 + $0x140] sm:$0xf]
    %v169 = vld [vmem:[#allocation5 + $0x144] sm:$0xff]
    %v170 = vld [vmem:[#allocation5 + $0x14c] sm:$0xf]
    %v171 = vld [vmem:[#allocation5 + $0x150] sm:$0xff]
    %v172 = vld [vmem:[#allocation5 + $0x158] sm:$0xf]
    %v173 = vld [vmem:[#allocation5 + $0x15c] sm:$0xff]
    %v174 = vld [vmem:[#allocation5 + $0x164] sm:$0xf]
    %v175 = vld [vmem:[#allocation5 + $0x168] sm:$0xff]
    %v176 = vld [vmem:[#allocation5 + $0x170] sm:$0xf]
    %v177 = vld [vmem:[#allocation5 + $0x174] sm:$0xff]
    %v178 = vld [vmem:[#allocation5 + $0x17c] sm:$0xf]
    %v179 = vld [vmem:[#allocation5 + $0x180] sm:$0xff]
    %v180 = vld [vmem:[#allocation5 + $0x188] sm:$0xf]
    %v181 = vld [vmem:[#allocation5 + $0x18c] sm:$0xff]
    %v182 = vld [vmem:[#allocation5 + $0x194] sm:$0xf]
    %v183 = vld [vmem:[#allocation5 + $0x198] sm:$0xff]
    %v184 = vld [vmem:[#allocation5 + $0x1a0] sm:$0xf]
    %v185 = vld [vmem:[#allocation5 + $0x1a4] sm:$0xff]
    %v186 = vld [vmem:[#allocation5 + $0x1ac] sm:$0xf]
    %v187 = vld [vmem:[#allocation5 + $0x1b0] sm:$0xff]
    %v188 = vld [vmem:[#allocation5 + $0x1b8] sm:$0xf]
    %v189 = vld [vmem:[#allocation5 + $0x1bc] sm:$0xff]
    %v190 = vld [vmem:[#allocation5 + $0x1c4] sm:$0xf]
    %v191 = vld [vmem:[#allocation5 + $0x1c8] sm:$0xff]
    %v192 = vld [vmem:[#allocation5 + $0x1d0] sm:$0xf]
    %v193 = vld [vmem:[#allocation5 + $0x1d4] sm:$0xff]
    %v194 = vld [vmem:[#allocation5 + $0x1dc] sm:$0xf]
    %v195 = vld [vmem:[#allocation5 + $0x1e0] sm:$0xff]
    %v196 = vld [vmem:[#allocation5 + $0x1e8] sm:$0xf]
    %v197 = vld [vmem:[#allocation5 + $0x1ec] sm:$0xff]
    %v198 = vld [vmem:[#allocation5 + $0x1f4] sm:$0xf]
    %v199 = vld [vmem:[#allocation5 + $0x1f8] sm:$0xff]
    %v200 = vld [vmem:[#allocation5 + $0x200] sm:$0xf]
    %v201 = vld [vmem:[#allocation5 + $0x204] sm:$0xff]
    %v202 = vld [vmem:[#allocation5 + $0x20c] sm:$0xf]
    %v203 = vld [vmem:[#allocation5 + $0x210] sm:$0xff]
    %v204 = vld [vmem:[#allocation5 + $0x218] sm:$0xf]
    %v205 = vld [vmem:[#allocation5 + $0x21c] sm:$0xff]
    %v206 = vld [vmem:[#allocation5 + $0x224] sm:$0xf]
    %v207 = vld [vmem:[#allocation5 + $0x228] sm:$0xff]
    %v208 = vld [vmem:[#allocation5 + $0x230] sm:$0xf]
    %v209 = vld [vmem:[#allocation5 + $0x234] sm:$0xff]
    %v210 = vld [vmem:[#allocation5 + $0x23c] sm:$0xf]
    %v211 = vld [vmem:[#allocation5 + $0x240] sm:$0xff]
    %v212 = vld [vmem:[#allocation5 + $0x248] sm:$0xf]
    %v213 = vld [vmem:[#allocation5 + $0x24c] sm:$0xff]
    %v214 = vld [vmem:[#allocation5 + $0x254] sm:$0xf]
    %v215 = vld [vmem:[#allocation5 + $0x258] sm:$0xff]
    %v216 = vld [vmem:[#allocation5 + $0x260] sm:$0xf]
    %v217 = vld [vmem:[#allocation5 + $0x264] sm:$0xff]
    %v218 = vld [vmem:[#allocation5 + $0x26c] sm:$0xf]
    %v219 = vld [vmem:[#allocation5 + $0x270] sm:$0xff]
    %v220 = vld [vmem:[#allocation5 + $0x278] sm:$0xf]
    %v221 = vld [vmem:[#allocation5 + $0x27c] sm:$0xff]
    %v222 = vld [vmem:[#allocation5 + $0x284] sm:$0xf]
    %v223 = vld [vmem:[#allocation5 + $0x288] sm:$0xff]
    %v224 = vld [vmem:[#allocation5 + $0x290] sm:$0xf]
    %v225 = vld [vmem:[#allocation5 + $0x294] sm:$0xff]
    %v226 = vld [vmem:[#allocation5 + $0x29c] sm:$0xf]
    %v227 = vld [vmem:[#allocation5 + $0x2a0] sm:$0xff]
    %v228 = vld [vmem:[#allocation5 + $0x2a8] sm:$0xf]
    %v229 = vld [vmem:[#allocation5 + $0x2ac] sm:$0xff]
    %v230 = vld [vmem:[#allocation5 + $0x2b4] sm:$0xf]
    %v231 = vld [vmem:[#allocation5 + $0x2b8] sm:$0xff]
    %v232 = vld [vmem:[#allocation5 + $0x2c0] sm:$0xf]
    %v233 = vld [vmem:[#allocation5 + $0x2c4] sm:$0xff]
    %v234 = vld [vmem:[#allocation5 + $0x2cc] sm:$0xf]
    %v235 = vld [vmem:[#allocation5 + $0x2d0] sm:$0xff]
    %v236 = vld [vmem:[#allocation5 + $0x2d8] sm:$0xf]
    %v237 = vld [vmem:[#allocation5 + $0x2dc] sm:$0xff]
    %v238 = vld [vmem:[#allocation5 + $0x2e4] sm:$0xf]
    %v239 = vld [vmem:[#allocation5 + $0x2e8] sm:$0xff]
    %v240 = vld [vmem:[#allocation5 + $0x2f0] sm:$0xf]
    %v241 = vld [vmem:[#allocation5 + $0x2f4] sm:$0xff]
    %v242 = vld [vmem:[#allocation5 + $0x2fc] sm:$0xf]
    %v243 = vld [vmem:[#allocation5 + $0x300] sm:$0xff]
    %v244 = vld [vmem:[#allocation5 + $0x308] sm:$0xf]
    %v245 = vld [vmem:[#allocation5 + $0x30c] sm:$0xff]
    %v246 = vld [vmem:[#allocation5 + $0x314] sm:$0xf]
    %v247 = vld [vmem:[#allocation5 + $0x318] sm:$0xff]
    %v248 = vld [vmem:[#allocation5 + $0x320] sm:$0xf]
    %v249 = vld [vmem:[#allocation5 + $0x324] sm:$0xff]
    %v250 = vld [vmem:[#allocation5 + $0x32c] sm:$0xf]
    %v251 = vld [vmem:[#allocation5 + $0x330] sm:$0xff]
    %v252 = vld [vmem:[#allocation5 + $0x338] sm:$0xf]
    %v253 = vld [vmem:[#allocation5 + $0x33c] sm:$0xff]
    %v254 = vld [vmem:[#allocation5 + $0x344] sm:$0xf]
    %v255 = vld [vmem:[#allocation5 + $0x348] sm:$0xff]
    %v256 = vld [vmem:[#allocation5 + $0x350] sm:$0xf]
    %v257 = vld [vmem:[#allocation5 + $0x354] sm:$0xff]
    %v258 = vld [vmem:[#allocation5 + $0x35c] sm:$0xf]
    %v259 = vld [vmem:[#allocation5 + $0x360] sm:$0xff]
    %v260 = vld [vmem:[#allocation5 + $0x368] sm:$0xf]
    %v261 = vld [vmem:[#allocation5 + $0x36c] sm:$0xff]
    %v262 = vld [vmem:[#allocation5 + $0x374] sm:$0xf]
    %v263 = vld [vmem:[#allocation5 + $0x378] sm:$0xff]
    %v264 = vld [vmem:[#allocation5 + $0x380] sm:$0xf]
    %v265 = vld [vmem:[#allocation5 + $0x384] sm:$0xff]
    %v266 = vld [vmem:[#allocation5 + $0x38c] sm:$0xf]
    %v267 = vld [vmem:[#allocation5 + $0x390] sm:$0xff]
    %v268 = vld [vmem:[#allocation5 + $0x398] sm:$0xf]
    %v269 = vld [vmem:[#allocation5 + $0x39c] sm:$0xff]
    %v270 = vld [vmem:[#allocation5 + $0x3a4] sm:$0xf]
    %v271 = vld [vmem:[#allocation5 + $0x3a8] sm:$0xff]
    %v272 = vld [vmem:[#allocation5 + $0x3b0] sm:$0xf]
    %v273 = vld [vmem:[#allocation5 + $0x3b4] sm:$0xff]
    %v274 = vld [vmem:[#allocation5 + $0x3bc] sm:$0xf]
    %v275 = vld [vmem:[#allocation5 + $0x3c0] sm:$0xff]
    %v276 = vld [vmem:[#allocation5 + $0x3c8] sm:$0xf]
    %v277 = vld [vmem:[#allocation5 + $0x3cc] sm:$0xff]
    %v278 = vld [vmem:[#allocation5 + $0x3d4] sm:$0xf]
    %v279 = vld [vmem:[#allocation5 + $0x3d8] sm:$0xff]
    %v280 = vld [vmem:[#allocation5 + $0x3e0] sm:$0xf]
    %v281 = vld [vmem:[#allocation5 + $0x3e4] sm:$0xff]
    %v282 = vld [vmem:[#allocation5 + $0x3ec] sm:$0xf]
    %v283 = vld [vmem:[#allocation5 + $0x3f0] sm:$0xff]
    %v284 = vld [vmem:[#allocation5 + $0x3f8] sm:$0xf]
    %v285 = vld [vmem:[#allocation5 + $0x3fc] sm:$0xff]
    %v286 = vld [vmem:[#allocation5 + $0x404] sm:$0xf]
    %v287 = vld [vmem:[#allocation5 + $0x408] sm:$0xff]
    %v288 = vld [vmem:[#allocation5 + $0x410] sm:$0xf]
    %v289 = vld [vmem:[#allocation5 + $0x414] sm:$0xff]
    %v290 = vld [vmem:[#allocation5 + $0x41c] sm:$0xf]
    %v291 = vld [vmem:[#allocation5 + $0x420] sm:$0xff]
    %v292 = vld [vmem:[#allocation5 + $0x428] sm:$0xf]
    %v293 = vld [vmem:[#allocation5 + $0x42c] sm:$0xff]
    %v294 = vld [vmem:[#allocation5 + $0x434] sm:$0xf]
    %v295 = vld [vmem:[#allocation5 + $0x438] sm:$0xff]
    %v296 = vld [vmem:[#allocation5 + $0x440] sm:$0xf]
    %v297 = vld [vmem:[#allocation5 + $0x444] sm:$0xff]
    %v298 = vld [vmem:[#allocation5 + $0x44c] sm:$0xf]
    %v299 = vld [vmem:[#allocation5 + $0x450] sm:$0xff]
    %v300 = vld [vmem:[#allocation5 + $0x458] sm:$0xf]
    %v301 = vld [vmem:[#allocation5 + $0x45c] sm:$0xff]
    %v302 = vld [vmem:[#allocation5 + $0x464] sm:$0xf]
    %v303 = vld [vmem:[#allocation5 + $0x468] sm:$0xff]
    %v304 = vld [vmem:[#allocation5 + $0x470] sm:$0xf]
    %v305 = vld [vmem:[#allocation5 + $0x474] sm:$0xff]
    %v306 = vld [vmem:[#allocation5 + $0x47c] sm:$0xf]
    %v307 = vld [vmem:[#allocation5 + $0x480] sm:$0xff]
    %v308 = vld [vmem:[#allocation5 + $0x488] sm:$0xf]
    %v309 = vld [vmem:[#allocation5 + $0x48c] sm:$0xff]
    %v310 = vld [vmem:[#allocation5 + $0x494] sm:$0xf]
    %v311 = vld [vmem:[#allocation5 + $0x498] sm:$0xff]
    %v312 = vld [vmem:[#allocation5 + $0x4a0] sm:$0xf]
    %v313 = vld [vmem:[#allocation5 + $0x4a4] sm:$0xff]
    %v314 = vld [vmem:[#allocation5 + $0x4ac] sm:$0xf]
    %v315 = vld [vmem:[#allocation5 + $0x4b0] sm:$0xff]
    %v316 = vld [vmem:[#allocation5 + $0x4b8] sm:$0xf]
    %v317 = vld [vmem:[#allocation5 + $0x4bc] sm:$0xff]
    %v318 = vld [vmem:[#allocation5 + $0x4c4] sm:$0xf]
    %v319 = vld [vmem:[#allocation5 + $0x4c8] sm:$0xff]
    %v320 = vld [vmem:[#allocation5 + $0x4d0] sm:$0xf]
    %v321 = vld [vmem:[#allocation5 + $0x4d4] sm:$0xff]
    %v322 = vld [vmem:[#allocation5 + $0x4dc] sm:$0xf]
    %v323 = vld [vmem:[#allocation5 + $0x4e0] sm:$0xff]
    %v324 = vld [vmem:[#allocation5 + $0x4e8] sm:$0xf]
    %v325 = vld [vmem:[#allocation5 + $0x4ec] sm:$0xff]
    %v326 = vld [vmem:[#allocation5 + $0x4f4] sm:$0xf]
    %v327 = vld [vmem:[#allocation5 + $0x4f8] sm:$0xff]
    %v328 = vld [vmem:[#allocation5 + $0x500] sm:$0xf]
    %v329 = vld [vmem:[#allocation5 + $0x504] sm:$0xff]
    %v330 = vld [vmem:[#allocation5 + $0x50c] sm:$0xf]
    %v331 = vld [vmem:[#allocation5 + $0x510] sm:$0xff]
    %v332 = vld [vmem:[#allocation5 + $0x518] sm:$0xf]
    %v333 = vld [vmem:[#allocation5 + $0x51c] sm:$0xff]
    %v334 = vld [vmem:[#allocation5 + $0x524] sm:$0xf]
    %v335 = vld [vmem:[#allocation5 + $0x528] sm:$0xff]
    %v336 = vld [vmem:[#allocation5 + $0x530] sm:$0xf]
    %v337 = vld [vmem:[#allocation5 + $0x534] sm:$0xff]
    %v338 = vld [vmem:[#allocation5 + $0x53c] sm:$0xf]
    %v339 = vld [vmem:[#allocation5 + $0x540] sm:$0xff]
    %v340 = vld [vmem:[#allocation5 + $0x548] sm:$0xf]
    %v341 = vld [vmem:[#allocation5 + $0x54c] sm:$0xff]
    %v342 = vld [vmem:[#allocation5 + $0x554] sm:$0xf]
    %v343 = vld [vmem:[#allocation5 + $0x558] sm:$0xff]
    %v344 = vld [vmem:[#allocation5 + $0x560] sm:$0xf]
    %v345 = vld [vmem:[#allocation5 + $0x564] sm:$0xff]
    %v346 = vld [vmem:[#allocation5 + $0x56c] sm:$0xf]
    %v347 = vld [vmem:[#allocation5 + $0x570] sm:$0xff]
    %v348 = vld [vmem:[#allocation5 + $0x578] sm:$0xf]
    %v349 = vld [vmem:[#allocation5 + $0x57c] sm:$0xff]
    %v350 = vld [vmem:[#allocation5 + $0x584] sm:$0xf]
    %v351 = vld [vmem:[#allocation5 + $0x588] sm:$0xff]
    %v352 = vld [vmem:[#allocation5 + $0x590] sm:$0xf]
    %v353 = vld [vmem:[#allocation5 + $0x594] sm:$0xff]
    %v354 = vld [vmem:[#allocation5 + $0x59c] sm:$0xf]
    %v355 = vld [vmem:[#allocation5 + $0x5a0] sm:$0xff]
    %v356 = vld [vmem:[#allocation5 + $0x5a8] sm:$0xf]
    %v357 = vld [vmem:[#allocation5 + $0x5ac] sm:$0xff]
    %v358 = vld [vmem:[#allocation5 + $0x5b4] sm:$0xf]
    %v359 = vld [vmem:[#allocation5 + $0x5b8] sm:$0xff]
    %v360 = vld [vmem:[#allocation5 + $0x5c0] sm:$0xf]
    %v361 = vld [vmem:[#allocation5 + $0x5c4] sm:$0xff]
    %v362 = vld [vmem:[#allocation5 + $0x5cc] sm:$0xf]
    %v363 = vld [vmem:[#allocation5 + $0x5d0] sm:$0xff]
    %v364 = vld [vmem:[#allocation5 + $0x5d8] sm:$0xf]
    %v365 = vld [vmem:[#allocation5 + $0x5dc] sm:$0xff]
    %v366 = vld [vmem:[#allocation5 + $0x5e4] sm:$0xf]
    %v367 = vld [vmem:[#allocation5 + $0x5e8] sm:$0xff]
    %v368 = vld [vmem:[#allocation5 + $0x5f0] sm:$0xf]
    %v369 = vld [vmem:[#allocation5 + $0x5f4] sm:$0xff]
    %v370 = vld [vmem:[#allocation5 + $0x5fc] sm:$0xf]
    %v371 = vld [vmem:[#allocation5 + $0x600] sm:$0xff]
    %v372 = vld [vmem:[#allocation5 + $0x608] sm:$0xf]
    %v373 = vld [vmem:[#allocation5 + $0x60c] sm:$0xff]
    %v374 = vld [vmem:[#allocation5 + $0x614] sm:$0xf]
    %v375 = vld [vmem:[#allocation5 + $0x618] sm:$0xff]
    %v376 = vld [vmem:[#allocation5 + $0x620] sm:$0xf]
    %v377 = vld [vmem:[#allocation5 + $0x624] sm:$0xff]
    %v378 = vld [vmem:[#allocation5 + $0x62c] sm:$0xf]
    %v379 = vld [vmem:[#allocation5 + $0x630] sm:$0xff]
    %v380 = vld [vmem:[#allocation5 + $0x638] sm:$0xf]
    %v381 = vld [vmem:[#allocation5 + $0x63c] sm:$0xff]
    %v382 = vld [vmem:[#allocation5 + $0x644] sm:$0xf]
    %v383 = vld [vmem:[#allocation5 + $0x648] sm:$0xff]
    %v384 = vld [vmem:[#allocation5 + $0x650] sm:$0xf]
    %v385 = vld [vmem:[#allocation5 + $0x654] sm:$0xff]
    %v386 = vld [vmem:[#allocation5 + $0x65c] sm:$0xf]
    %v387 = vld [vmem:[#allocation5 + $0x660] sm:$0xff]
    %v388 = vld [vmem:[#allocation5 + $0x668] sm:$0xf]
    %v389 = vld [vmem:[#allocation5 + $0x66c] sm:$0xff]
    %v390 = vld [vmem:[#allocation5 + $0x674] sm:$0xf]
    %v391 = vld [vmem:[#allocation5 + $0x678] sm:$0xff]
    %v392 = vld [vmem:[#allocation5 + $0x680] sm:$0xf]
    %v393 = vld [vmem:[#allocation5 + $0x684] sm:$0xff]
    %v394 = vld [vmem:[#allocation5 + $0x68c] sm:$0xf]
    %v395 = vld [vmem:[#allocation5 + $0x690] sm:$0xff]
    %v396 = vld [vmem:[#allocation5 + $0x698] sm:$0xf]
    %v397 = vld [vmem:[#allocation5 + $0x69c] sm:$0xff]
    %v398 = vld [vmem:[#allocation5 + $0x6a4] sm:$0xf]
    %v399 = vld [vmem:[#allocation5 + $0x6a8] sm:$0xff]
    %v400 = vld [vmem:[#allocation5 + $0x6b0] sm:$0xf]
    %v401 = vld [vmem:[#allocation5 + $0x6b4] sm:$0xff]
    %v402 = vld [vmem:[#allocation5 + $0x6bc] sm:$0xf]
    %v408 = vunpack.c.l.b16 %v35
    %v409 = vunpack.c.h.b16 %v35
    %v410 = vunpack.c.l.b16 %v36
    %v411 = vunpack.c.h.b16 %v36
    %v412 = vunpack.c.l.b16 %v37
    %v413 = vunpack.c.h.b16 %v37
    %v414 = vunpack.c.l.b16 %v38
    %v415 = vunpack.c.h.b16 %v38
    %v416 = vunpack.c.l.b16 %v39
    %v417 = vpack.c.b16 %v408, %v408
    %v418 = vpack.c.b16 %v409, %v409
    %v419 = vpack.c.b16 %v410, %v410
    %v420 = vpack.c.b16 %v411, %v411
    %v421 = vpack.c.b16 %v412, %v412
    %v422 = vpack.c.b16 %v413, %v413
    %v423 = vpack.c.b16 %v414, %v414
    %v424 = vpack.c.b16 %v415, %v415
    %v425 = vpack.c.b16 %v416, %v416
    %v723 = vunpack.c.l.b16 %v115
    %v724 = vunpack.c.h.b16 %v115
    %v725 = vunpack.c.l.b16 %v116
    %v726 = vunpack.c.l.b16 %v117
    %v727 = vunpack.c.h.b16 %v117
    %v728 = vunpack.c.l.b16 %v118
    %v729 = vunpack.c.l.b16 %v119
    %v730 = vunpack.c.h.b16 %v119
    %v731 = vunpack.c.l.b16 %v120
    %v732 = vunpack.c.l.b16 %v121
    %v733 = vunpack.c.h.b16 %v121
    %v734 = vunpack.c.l.b16 %v122
    %v735 = vunpack.c.l.b16 %v123
    %v736 = vunpack.c.h.b16 %v123
    %v737 = vunpack.c.l.b16 %v124
    %v738 = vunpack.c.l.b16 %v125
    %v739 = vunpack.c.h.b16 %v125
    %v740 = vunpack.c.l.b16 %v126
    %v741 = vunpack.c.l.b16 %v127
    %v742 = vunpack.c.h.b16 %v127
    %v743 = vunpack.c.l.b16 %v128
    %v744 = vunpack.c.l.b16 %v129
    %v745 = vunpack.c.h.b16 %v129
    %v746 = vunpack.c.l.b16 %v130
    %v747 = vunpack.c.l.b16 %v131
    %v748 = vunpack.c.h.b16 %v131
    %v749 = vunpack.c.l.b16 %v132
    %v750 = vunpack.c.l.b16 %v133
    %v751 = vunpack.c.h.b16 %v133
    %v752 = vunpack.c.l.b16 %v134
    %v753 = vunpack.c.l.b16 %v135
    %v754 = vunpack.c.h.b16 %v135
    %v755 = vunpack.c.l.b16 %v136
    %v756 = vunpack.c.l.b16 %v137
    %v757 = vunpack.c.h.b16 %v137
    %v758 = vunpack.c.l.b16 %v138
    %v759 = vunpack.c.l.b16 %v139
    %v760 = vunpack.c.h.b16 %v139
    %v761 = vunpack.c.l.b16 %v140
    %v762 = vunpack.c.l.b16 %v141
    %v763 = vunpack.c.h.b16 %v141
    %v764 = vunpack.c.l.b16 %v142
    %v765 = vunpack.c.l.b16 %v143
    %v766 = vunpack.c.h.b16 %v143
    %v767 = vunpack.c.l.b16 %v144
    %v768 = vunpack.c.l.b16 %v145
    %v769 = vunpack.c.h.b16 %v145
    %v770 = vunpack.c.l.b16 %v146
    %v771 = vunpack.c.l.b16 %v147
    %v772 = vunpack.c.h.b16 %v147
    %v773 = vunpack.c.l.b16 %v148
    %v774 = vunpack.c.l.b16 %v149
    %v775 = vunpack.c.h.b16 %v149
    %v776 = vunpack.c.l.b16 %v150
    %v777 = vunpack.c.l.b16 %v151
    %v778 = vunpack.c.h.b16 %v151
    %v779 = vunpack.c.l.b16 %v152
    %v780 = vunpack.c.l.b16 %v153
    %v781 = vunpack.c.h.b16 %v153
    %v782 = vunpack.c.l.b16 %v154
    %v783 = vunpack.c.l.b16 %v155
    %v784 = vunpack.c.h.b16 %v155
    %v785 = vunpack.c.l.b16 %v156
    %v786 = vunpack.c.l.b16 %v157
    %v787 = vunpack.c.h.b16 %v157
    %v788 = vunpack.c.l.b16 %v158
    %v789 = vunpack.c.l.b16 %v159
    %v790 = vunpack.c.h.b16 %v159
    %v791 = vunpack.c.l.b16 %v160
    %v792 = vunpack.c.l.b16 %v161
    %v793 = vunpack.c.h.b16 %v161
    %v794 = vunpack.c.l.b16 %v162
    %v795 = vunpack.c.l.b16 %v163
    %v796 = vunpack.c.h.b16 %v163
    %v797 = vunpack.c.l.b16 %v164
    %v798 = vunpack.c.l.b16 %v165
    %v799 = vunpack.c.h.b16 %v165
    %v800 = vunpack.c.l.b16 %v166
    %v801 = vunpack.c.l.b16 %v167
    %v802 = vunpack.c.h.b16 %v167
    %v803 = vunpack.c.l.b16 %v168
    %v804 = vunpack.c.l.b16 %v169
    %v805 = vunpack.c.h.b16 %v169
    %v806 = vunpack.c.l.b16 %v170
    %v807 = vunpack.c.l.b16 %v171
    %v808 = vunpack.c.h.b16 %v171
    %v809 = vunpack.c.l.b16 %v172
    %v810 = vunpack.c.l.b16 %v173
    %v811 = vunpack.c.h.b16 %v173
    %v812 = vunpack.c.l.b16 %v174
    %v813 = vunpack.c.l.b16 %v175
    %v814 = vunpack.c.h.b16 %v175
    %v815 = vunpack.c.l.b16 %v176
    %v816 = vunpack.c.l.b16 %v177
    %v817 = vunpack.c.h.b16 %v177
    %v818 = vunpack.c.l.b16 %v178
    %v819 = vunpack.c.l.b16 %v179
    %v820 = vunpack.c.h.b16 %v179
    %v821 = vunpack.c.l.b16 %v180
    %v822 = vunpack.c.l.b16 %v181
    %v823 = vunpack.c.h.b16 %v181
    %v824 = vunpack.c.l.b16 %v182
    %v825 = vunpack.c.l.b16 %v183
    %v826 = vunpack.c.h.b16 %v183
    %v827 = vunpack.c.l.b16 %v184
    %v828 = vunpack.c.l.b16 %v185
    %v829 = vunpack.c.h.b16 %v185
    %v830 = vunpack.c.l.b16 %v186
    %v831 = vunpack.c.l.b16 %v187
    %v832 = vunpack.c.h.b16 %v187
    %v833 = vunpack.c.l.b16 %v188
    %v834 = vunpack.c.l.b16 %v189
    %v835 = vunpack.c.h.b16 %v189
    %v836 = vunpack.c.l.b16 %v190
    %v837 = vunpack.c.l.b16 %v191
    %v838 = vunpack.c.h.b16 %v191
    %v839 = vunpack.c.l.b16 %v192
    %v840 = vunpack.c.l.b16 %v193
    %v841 = vunpack.c.h.b16 %v193
    %v842 = vunpack.c.l.b16 %v194
    %v843 = vunpack.c.l.b16 %v195
    %v844 = vunpack.c.h.b16 %v195
    %v845 = vunpack.c.l.b16 %v196
    %v846 = vunpack.c.l.b16 %v197
    %v847 = vunpack.c.h.b16 %v197
    %v848 = vunpack.c.l.b16 %v198
    %v849 = vunpack.c.l.b16 %v199
    %v850 = vunpack.c.h.b16 %v199
    %v851 = vunpack.c.l.b16 %v200
    %v852 = vunpack.c.l.b16 %v201
    %v853 = vunpack.c.h.b16 %v201
    %v854 = vunpack.c.l.b16 %v202
    %v855 = vunpack.c.l.b16 %v203
    %v856 = vunpack.c.h.b16 %v203
    %v857 = vunpack.c.l.b16 %v204
    %v858 = vunpack.c.l.b16 %v205
    %v859 = vunpack.c.h.b16 %v205
    %v860 = vunpack.c.l.b16 %v206
    %v861 = vunpack.c.l.b16 %v207
    %v862 = vunpack.c.h.b16 %v207
    %v863 = vunpack.c.l.b16 %v208
    %v864 = vunpack.c.l.b16 %v209
    %v865 = vunpack.c.h.b16 %v209
    %v866 = vunpack.c.l.b16 %v210
    %v867 = vunpack.c.l.b16 %v211
    %v868 = vunpack.c.h.b16 %v211
    %v869 = vunpack.c.l.b16 %v212
    %v870 = vunpack.c.l.b16 %v213
    %v871 = vunpack.c.h.b16 %v213
    %v872 = vunpack.c.l.b16 %v214
    %v873 = vunpack.c.l.b16 %v215
    %v874 = vunpack.c.h.b16 %v215
    %v875 = vunpack.c.l.b16 %v216
    %v876 = vunpack.c.l.b16 %v217
    %v877 = vunpack.c.h.b16 %v217
    %v878 = vunpack.c.l.b16 %v218
    %v879 = vunpack.c.l.b16 %v219
    %v880 = vunpack.c.h.b16 %v219
    %v881 = vunpack.c.l.b16 %v220
    %v882 = vunpack.c.l.b16 %v221
    %v883 = vunpack.c.h.b16 %v221
    %v884 = vunpack.c.l.b16 %v222
    %v885 = vunpack.c.l.b16 %v223
    %v886 = vunpack.c.h.b16 %v223
    %v887 = vunpack.c.l.b16 %v224
    %v888 = vunpack.c.l.b16 %v225
    %v889 = vunpack.c.h.b16 %v225
    %v890 = vunpack.c.l.b16 %v226
    %v891 = vunpack.c.l.b16 %v227
    %v892 = vunpack.c.h.b16 %v227
    %v893 = vunpack.c.l.b16 %v228
    %v894 = vunpack.c.l.b16 %v229
    %v895 = vunpack.c.h.b16 %v229
    %v896 = vunpack.c.l.b16 %v230
    %v897 = vunpack.c.l.b16 %v231
    %v898 = vunpack.c.h.b16 %v231
    %v899 = vunpack.c.l.b16 %v232
    %v900 = vunpack.c.l.b16 %v233
    %v901 = vunpack.c.h.b16 %v233
    %v902 = vunpack.c.l.b16 %v234
    %v903 = vunpack.c.l.b16 %v235
    %v904 = vunpack.c.h.b16 %v235
    %v905 = vunpack.c.l.b16 %v236
    %v906 = vunpack.c.l.b16 %v237
    %v907 = vunpack.c.h.b16 %v237
    %v908 = vunpack.c.l.b16 %v238
    %v909 = vunpack.c.l.b16 %v239
    %v910 = vunpack.c.h.b16 %v239
    %v911 = vunpack.c.l.b16 %v240
    %v912 = vunpack.c.l.b16 %v241
    %v913 = vunpack.c.h.b16 %v241
    %v914 = vunpack.c.l.b16 %v242
    %v915 = vunpack.c.l.b16 %v243
    %v916 = vunpack.c.h.b16 %v243
    %v917 = vunpack.c.l.b16 %v244
    %v918 = vunpack.c.l.b16 %v245
    %v919 = vunpack.c.h.b16 %v245
    %v920 = vunpack.c.l.b16 %v246
    %v921 = vunpack.c.l.b16 %v247
    %v922 = vunpack.c.h.b16 %v247
    %v923 = vunpack.c.l.b16 %v248
    %v924 = vunpack.c.l.b16 %v249
    %v925 = vunpack.c.h.b16 %v249
    %v926 = vunpack.c.l.b16 %v250
    %v927 = vunpack.c.l.b16 %v251
    %v928 = vunpack.c.h.b16 %v251
    %v929 = vunpack.c.l.b16 %v252
    %v930 = vunpack.c.l.b16 %v253
    %v931 = vunpack.c.h.b16 %v253
    %v932 = vunpack.c.l.b16 %v254
    %v933 = vunpack.c.l.b16 %v255
    %v934 = vunpack.c.h.b16 %v255
    %v935 = vunpack.c.l.b16 %v256
    %v936 = vunpack.c.l.b16 %v257
    %v937 = vunpack.c.h.b16 %v257
    %v938 = vunpack.c.l.b16 %v258
    %v939 = vunpack.c.l.b16 %v259
    %v940 = vunpack.c.h.b16 %v259
    %v941 = vunpack.c.l.b16 %v260
    %v942 = vunpack.c.l.b16 %v261
    %v943 = vunpack.c.h.b16 %v261
    %v944 = vunpack.c.l.b16 %v262
    %v945 = vunpack.c.l.b16 %v263
    %v946 = vunpack.c.h.b16 %v263
    %v947 = vunpack.c.l.b16 %v264
    %v948 = vunpack.c.l.b16 %v265
    %v949 = vunpack.c.h.b16 %v265
    %v950 = vunpack.c.l.b16 %v266
    %v951 = vunpack.c.l.b16 %v267
    %v952 = vunpack.c.h.b16 %v267
    %v953 = vunpack.c.l.b16 %v268
    %v954 = vunpack.c.l.b16 %v269
    %v955 = vunpack.c.h.b16 %v269
    %v956 = vunpack.c.l.b16 %v270
    %v957 = vunpack.c.l.b16 %v271
    %v958 = vunpack.c.h.b16 %v271
    %v959 = vunpack.c.l.b16 %v272
    %v960 = vunpack.c.l.b16 %v273
    %v961 = vunpack.c.h.b16 %v273
    %v962 = vunpack.c.l.b16 %v274
    %v963 = vunpack.c.l.b16 %v275
    %v964 = vunpack.c.h.b16 %v275
    %v965 = vunpack.c.l.b16 %v276
    %v966 = vunpack.c.l.b16 %v277
    %v967 = vunpack.c.h.b16 %v277
    %v968 = vunpack.c.l.b16 %v278
    %v969 = vunpack.c.l.b16 %v279
    %v970 = vunpack.c.h.b16 %v279
    %v971 = vunpack.c.l.b16 %v280
    %v972 = vunpack.c.l.b16 %v281
    %v973 = vunpack.c.h.b16 %v281
    %v974 = vunpack.c.l.b16 %v282
    %v975 = vunpack.c.l.b16 %v283
    %v976 = vunpack.c.h.b16 %v283
    %v977 = vunpack.c.l.b16 %v284
    %v978 = vunpack.c.l.b16 %v285
    %v979 = vunpack.c.h.b16 %v285
    %v980 = vunpack.c.l.b16 %v286
    %v981 = vunpack.c.l.b16 %v287
    %v982 = vunpack.c.h.b16 %v287
    %v983 = vunpack.c.l.b16 %v288
    %v984 = vunpack.c.l.b16 %v289
    %v985 = vunpack.c.h.b16 %v289
    %v986 = vunpack.c.l.b16 %v290
    %v987 = vunpack.c.l.b16 %v291
    %v988 = vunpack.c.h.b16 %v291
    %v989 = vunpack.c.l.b16 %v292
    %v990 = vunpack.c.l.b16 %v293
    %v991 = vunpack.c.h.b16 %v293
    %v992 = vunpack.c.l.b16 %v294
    %v993 = vunpack.c.l.b16 %v295
    %v994 = vunpack.c.h.b16 %v295
    %v995 = vunpack.c.l.b16 %v296
    %v996 = vunpack.c.l.b16 %v297
    %v997 = vunpack.c.h.b16 %v297
    %v998 = vunpack.c.l.b16 %v298
    %v999 = vunpack.c.l.b16 %v299
    %v1000 = vunpack.c.h.b16 %v299
    %v1001 = vunpack.c.l.b16 %v300
    %v1002 = vunpack.c.l.b16 %v301
    %v1003 = vunpack.c.h.b16 %v301
    %v1004 = vunpack.c.l.b16 %v302
    %v1005 = vunpack.c.l.b16 %v303
    %v1006 = vunpack.c.h.b16 %v303
    %v1007 = vunpack.c.l.b16 %v304
    %v1008 = vunpack.c.l.b16 %v305
    %v1009 = vunpack.c.h.b16 %v305
    %v1010 = vunpack.c.l.b16 %v306
    %v1011 = vunpack.c.l.b16 %v307
    %v1012 = vunpack.c.h.b16 %v307
    %v1013 = vunpack.c.l.b16 %v308
    %v1014 = vunpack.c.l.b16 %v309
    %v1015 = vunpack.c.h.b16 %v309
    %v1016 = vunpack.c.l.b16 %v310
    %v1017 = vunpack.c.l.b16 %v311
    %v1018 = vunpack.c.h.b16 %v311
    %v1019 = vunpack.c.l.b16 %v312
    %v1020 = vunpack.c.l.b16 %v313
    %v1021 = vunpack.c.h.b16 %v313
    %v1022 = vunpack.c.l.b16 %v314
    %v1023 = vunpack.c.l.b16 %v315
    %v1024 = vunpack.c.h.b16 %v315
    %v1025 = vunpack.c.l.b16 %v316
    %v1026 = vunpack.c.l.b16 %v317
    %v1027 = vunpack.c.h.b16 %v317
    %v1028 = vunpack.c.l.b16 %v318
    %v1029 = vunpack.c.l.b16 %v319
    %v1030 = vunpack.c.h.b16 %v319
    %v1031 = vunpack.c.l.b16 %v320
    %v1032 = vunpack.c.l.b16 %v321
    %v1033 = vunpack.c.h.b16 %v321
    %v1034 = vunpack.c.l.b16 %v322
    %v1035 = vunpack.c.l.b16 %v323
    %v1036 = vunpack.c.h.b16 %v323
    %v1037 = vunpack.c.l.b16 %v324
    %v1038 = vunpack.c.l.b16 %v325
    %v1039 = vunpack.c.h.b16 %v325
    %v1040 = vunpack.c.l.b16 %v326
    %v1041 = vunpack.c.l.b16 %v327
    %v1042 = vunpack.c.h.b16 %v327
    %v1043 = vunpack.c.l.b16 %v328
    %v1044 = vunpack.c.l.b16 %v329
    %v1045 = vunpack.c.h.b16 %v329
    %v1046 = vunpack.c.l.b16 %v330
    %v1047 = vunpack.c.l.b16 %v331
    %v1048 = vunpack.c.h.b16 %v331
    %v1049 = vunpack.c.l.b16 %v332
    %v1050 = vunpack.c.l.b16 %v333
    %v1051 = vunpack.c.h.b16 %v333
    %v1052 = vunpack.c.l.b16 %v334
    %v1053 = vunpack.c.l.b16 %v335
    %v1054 = vunpack.c.h.b16 %v335
    %v1055 = vunpack.c.l.b16 %v336
    %v1056 = vunpack.c.l.b16 %v337
    %v1057 = vunpack.c.h.b16 %v337
    %v1058 = vunpack.c.l.b16 %v338
    %v1059 = vunpack.c.l.b16 %v339
    %v1060 = vunpack.c.h.b16 %v339
    %v1061 = vunpack.c.l.b16 %v340
    %v1062 = vunpack.c.l.b16 %v341
    %v1063 = vunpack.c.h.b16 %v341
    %v1064 = vunpack.c.l.b16 %v342
    %v1065 = vunpack.c.l.b16 %v343
    %v1066 = vunpack.c.h.b16 %v343
    %v1067 = vunpack.c.l.b16 %v344
    %v1068 = vunpack.c.l.b16 %v345
    %v1069 = vunpack.c.h.b16 %v345
    %v1070 = vunpack.c.l.b16 %v346
    %v1071 = vunpack.c.l.b16 %v347
    %v1072 = vunpack.c.h.b16 %v347
    %v1073 = vunpack.c.l.b16 %v348
    %v1074 = vunpack.c.l.b16 %v349
    %v1075 = vunpack.c.h.b16 %v349
    %v1076 = vunpack.c.l.b16 %v350
    %v1077 = vunpack.c.l.b16 %v351
    %v1078 = vunpack.c.h.b16 %v351
    %v1079 = vunpack.c.l.b16 %v352
    %v1080 = vunpack.c.l.b16 %v353
    %v1081 = vunpack.c.h.b16 %v353
    %v1082 = vunpack.c.l.b16 %v354
    %v1083 = vunpack.c.l.b16 %v355
    %v1084 = vunpack.c.h.b16 %v355
    %v1085 = vunpack.c.l.b16 %v356
    %v1086 = vunpack.c.l.b16 %v357
    %v1087 = vunpack.c.h.b16 %v357
    %v1088 = vunpack.c.l.b16 %v358
    %v1089 = vunpack.c.l.b16 %v359
    %v1090 = vunpack.c.h.b16 %v359
    %v1091 = vunpack.c.l.b16 %v360
    %v1092 = vunpack.c.l.b16 %v361
    %v1093 = vunpack.c.h.b16 %v361
    %v1094 = vunpack.c.l.b16 %v362
    %v1095 = vunpack.c.l.b16 %v363
    %v1096 = vunpack.c.h.b16 %v363
    %v1097 = vunpack.c.l.b16 %v364
    %v1098 = vunpack.c.l.b16 %v365
    %v1099 = vunpack.c.h.b16 %v365
    %v1100 = vunpack.c.l.b16 %v366
    %v1101 = vunpack.c.l.b16 %v367
    %v1102 = vunpack.c.h.b16 %v367
    %v1103 = vunpack.c.l.b16 %v368
    %v1104 = vunpack.c.l.b16 %v369
    %v1105 = vunpack.c.h.b16 %v369
    %v1106 = vunpack.c.l.b16 %v370
    %v1107 = vunpack.c.l.b16 %v371
    %v1108 = vunpack.c.h.b16 %v371
    %v1109 = vunpack.c.l.b16 %v372
    %v1110 = vunpack.c.l.b16 %v373
    %v1111 = vunpack.c.h.b16 %v373
    %v1112 = vunpack.c.l.b16 %v374
    %v1113 = vunpack.c.l.b16 %v375
    %v1114 = vunpack.c.h.b16 %v375
    %v1115 = vunpack.c.l.b16 %v376
    %v1116 = vunpack.c.l.b16 %v377
    %v1117 = vunpack.c.h.b16 %v377
    %v1118 = vunpack.c.l.b16 %v378
    %v1119 = vunpack.c.l.b16 %v379
    %v1120 = vunpack.c.h.b16 %v379
    %v1121 = vunpack.c.l.b16 %v380
    %v1122 = vunpack.c.l.b16 %v381
    %v1123 = vunpack.c.h.b16 %v381
    %v1124 = vunpack.c.l.b16 %v382
    %v1125 = vunpack.c.l.b16 %v383
    %v1126 = vunpack.c.h.b16 %v383
    %v1127 = vunpack.c.l.b16 %v384
    %v1128 = vunpack.c.l.b16 %v385
    %v1129 = vunpack.c.h.b16 %v385
    %v1130 = vunpack.c.l.b16 %v386
    %v1131 = vunpack.c.l.b16 %v387
    %v1132 = vunpack.c.h.b16 %v387
    %v1133 = vunpack.c.l.b16 %v388
    %v1134 = vunpack.c.l.b16 %v389
    %v1135 = vunpack.c.h.b16 %v389
    %v1136 = vunpack.c.l.b16 %v390
    %v1137 = vunpack.c.l.b16 %v391
    %v1138 = vunpack.c.h.b16 %v391
    %v1139 = vunpack.c.l.b16 %v392
    %v1140 = vunpack.c.l.b16 %v393
    %v1141 = vunpack.c.h.b16 %v393
    %v1142 = vunpack.c.l.b16 %v394
    %v1143 = vunpack.c.l.b16 %v395
    %v1144 = vunpack.c.h.b16 %v395
    %v1145 = vunpack.c.l.b16 %v396
    %v1146 = vunpack.c.l.b16 %v397
    %v1147 = vunpack.c.h.b16 %v397
    %v1148 = vunpack.c.l.b16 %v398
    %v1149 = vunpack.c.l.b16 %v399
    %v1150 = vunpack.c.h.b16 %v399
    %v1151 = vunpack.c.l.b16 %v400
    %v1152 = vunpack.c.l.b16 %v401
    %v1153 = vunpack.c.h.b16 %v401
    %v1154 = vunpack.c.l.b16 %v402
    %v1155 = vpack.c.b16 %v726, %v723
    %v1156 = vpack.c.b16 %v727, %v724
    %v1157 = vpack.c.b16 %v728, %v725
    %v1158 = vpack.c.b16 %v732, %v729
    %v1159 = vpack.c.b16 %v733, %v730
    %v1160 = vpack.c.b16 %v734, %v731
    %v1161 = vpack.c.b16 %v738, %v735
    %v1162 = vpack.c.b16 %v739, %v736
    %v1163 = vpack.c.b16 %v740, %v737
    %v1164 = vpack.c.b16 %v744, %v741
    %v1165 = vpack.c.b16 %v745, %v742
    %v1166 = vpack.c.b16 %v746, %v743
    %v1167 = vpack.c.b16 %v750, %v747
    %v1168 = vpack.c.b16 %v751, %v748
    %v1169 = vpack.c.b16 %v752, %v749
    %v1170 = vpack.c.b16 %v756, %v753
    %v1171 = vpack.c.b16 %v757, %v754
    %v1172 = vpack.c.b16 %v758, %v755
    %v1173 = vpack.c.b16 %v762, %v759
    %v1174 = vpack.c.b16 %v763, %v760
    %v1175 = vpack.c.b16 %v764, %v761
    %v1176 = vpack.c.b16 %v768, %v765
    %v1177 = vpack.c.b16 %v769, %v766
    %v1178 = vpack.c.b16 %v770, %v767
    %v1179 = vpack.c.b16 %v774, %v771
    %v1180 = vpack.c.b16 %v775, %v772
    %v1181 = vpack.c.b16 %v776, %v773
    %v1182 = vpack.c.b16 %v780, %v777
    %v1183 = vpack.c.b16 %v781, %v778
    %v1184 = vpack.c.b16 %v782, %v779
    %v1185 = vpack.c.b16 %v786, %v783
    %v1186 = vpack.c.b16 %v787, %v784
    %v1187 = vpack.c.b16 %v788, %v785
    %v1188 = vpack.c.b16 %v792, %v789
    %v1189 = vpack.c.b16 %v793, %v790
    %v1190 = vpack.c.b16 %v794, %v791
    %v1191 = vpack.c.b16 %v798, %v795
    %v1192 = vpack.c.b16 %v799, %v796
    %v1193 = vpack.c.b16 %v800, %v797
    %v1194 = vpack.c.b16 %v804, %v801
    %v1195 = vpack.c.b16 %v805, %v802
    %v1196 = vpack.c.b16 %v806, %v803
    %v1197 = vpack.c.b16 %v810, %v807
    %v1198 = vpack.c.b16 %v811, %v808
    %v1199 = vpack.c.b16 %v812, %v809
    %v1200 = vpack.c.b16 %v816, %v813
    %v1201 = vpack.c.b16 %v817, %v814
    %v1202 = vpack.c.b16 %v818, %v815
    %v1203 = vpack.c.b16 %v822, %v819
    %v1204 = vpack.c.b16 %v823, %v820
    %v1205 = vpack.c.b16 %v824, %v821
    %v1206 = vpack.c.b16 %v828, %v825
    %v1207 = vpack.c.b16 %v829, %v826
    %v1208 = vpack.c.b16 %v830, %v827
    %v1209 = vpack.c.b16 %v834, %v831
    %v1210 = vpack.c.b16 %v835, %v832
    %v1211 = vpack.c.b16 %v836, %v833
    %v1212 = vpack.c.b16 %v840, %v837
    %v1213 = vpack.c.b16 %v841, %v838
    %v1214 = vpack.c.b16 %v842, %v839
    %v1215 = vpack.c.b16 %v846, %v843
    %v1216 = vpack.c.b16 %v847, %v844
    %v1217 = vpack.c.b16 %v848, %v845
    %v1218 = vpack.c.b16 %v852, %v849
    %v1219 = vpack.c.b16 %v853, %v850
    %v1220 = vpack.c.b16 %v854, %v851
    %v1221 = vpack.c.b16 %v858, %v855
    %v1222 = vpack.c.b16 %v859, %v856
    %v1223 = vpack.c.b16 %v860, %v857
    %v1224 = vpack.c.b16 %v864, %v861
    %v1225 = vpack.c.b16 %v865, %v862
    %v1226 = vpack.c.b16 %v866, %v863
    %v1227 = vpack.c.b16 %v870, %v867
    %v1228 = vpack.c.b16 %v871, %v868
    %v1229 = vpack.c.b16 %v872, %v869
    %v1230 = vpack.c.b16 %v876, %v873
    %v1231 = vpack.c.b16 %v877, %v874
    %v1232 = vpack.c.b16 %v878, %v875
    %v1233 = vpack.c.b16 %v882, %v879
    %v1234 = vpack.c.b16 %v883, %v880
    %v1235 = vpack.c.b16 %v884, %v881
    %v1236 = vpack.c.b16 %v888, %v885
    %v1237 = vpack.c.b16 %v889, %v886
    %v1238 = vpack.c.b16 %v890, %v887
    %v1239 = vpack.c.b16 %v894, %v891
    %v1240 = vpack.c.b16 %v895, %v892
    %v1241 = vpack.c.b16 %v896, %v893
    %v1242 = vpack.c.b16 %v900, %v897
    %v1243 = vpack.c.b16 %v901, %v898
    %v1244 = vpack.c.b16 %v902, %v899
    %v1245 = vpack.c.b16 %v906, %v903
    %v1246 = vpack.c.b16 %v907, %v904
    %v1247 = vpack.c.b16 %v908, %v905
    %v1248 = vpack.c.b16 %v912, %v909
    %v1249 = vpack.c.b16 %v913, %v910
    %v1250 = vpack.c.b16 %v914, %v911
    %v1251 = vpack.c.b16 %v918, %v915
    %v1252 = vpack.c.b16 %v919, %v916
    %v1253 = vpack.c.b16 %v920, %v917
    %v1254 = vpack.c.b16 %v924, %v921
    %v1255 = vpack.c.b16 %v925, %v922
    %v1256 = vpack.c.b16 %v926, %v923
    %v1257 = vpack.c.b16 %v930, %v927
    %v1258 = vpack.c.b16 %v931, %v928
    %v1259 = vpack.c.b16 %v932, %v929
    %v1260 = vpack.c.b16 %v936, %v933
    %v1261 = vpack.c.b16 %v937, %v934
    %v1262 = vpack.c.b16 %v938, %v935
    %v1263 = vpack.c.b16 %v942, %v939
    %v1264 = vpack.c.b16 %v943, %v940
    %v1265 = vpack.c.b16 %v944, %v941
    %v1266 = vpack.c.b16 %v948, %v945
    %v1267 = vpack.c.b16 %v949, %v946
    %v1268 = vpack.c.b16 %v950, %v947
    %v1269 = vpack.c.b16 %v954, %v951
    %v1270 = vpack.c.b16 %v955, %v952
    %v1271 = vpack.c.b16 %v956, %v953
    %v1272 = vpack.c.b16 %v960, %v957
    %v1273 = vpack.c.b16 %v961, %v958
    %v1274 = vpack.c.b16 %v962, %v959
    %v1275 = vpack.c.b16 %v966, %v963
    %v1276 = vpack.c.b16 %v967, %v964
    %v1277 = vpack.c.b16 %v968, %v965
    %v1278 = vpack.c.b16 %v972, %v969
    %v1279 = vpack.c.b16 %v973, %v970
    %v1280 = vpack.c.b16 %v974, %v971
    %v1281 = vpack.c.b16 %v978, %v975
    %v1282 = vpack.c.b16 %v979, %v976
    %v1283 = vpack.c.b16 %v980, %v977
    %v1284 = vpack.c.b16 %v984, %v981
    %v1285 = vpack.c.b16 %v985, %v982
    %v1286 = vpack.c.b16 %v986, %v983
    %v1287 = vpack.c.b16 %v990, %v987
    %v1288 = vpack.c.b16 %v991, %v988
    %v1289 = vpack.c.b16 %v992, %v989
    %v1290 = vpack.c.b16 %v996, %v993
    %v1291 = vpack.c.b16 %v997, %v994
    %v1292 = vpack.c.b16 %v998, %v995
    %v1293 = vpack.c.b16 %v1002, %v999
    %v1294 = vpack.c.b16 %v1003, %v1000
    %v1295 = vpack.c.b16 %v1004, %v1001
    %v1296 = vpack.c.b16 %v1008, %v1005
    %v1297 = vpack.c.b16 %v1009, %v1006
    %v1298 = vpack.c.b16 %v1010, %v1007
    %v1299 = vpack.c.b16 %v1014, %v1011
    %v1300 = vpack.c.b16 %v1015, %v1012
    %v1301 = vpack.c.b16 %v1016, %v1013
    %v1302 = vpack.c.b16 %v1020, %v1017
    %v1303 = vpack.c.b16 %v1021, %v1018
    %v1304 = vpack.c.b16 %v1022, %v1019
    %v1305 = vpack.c.b16 %v1026, %v1023
    %v1306 = vpack.c.b16 %v1027, %v1024
    %v1307 = vpack.c.b16 %v1028, %v1025
    %v1308 = vpack.c.b16 %v1032, %v1029
    %v1309 = vpack.c.b16 %v1033, %v1030
    %v1310 = vpack.c.b16 %v1034, %v1031
    %v1311 = vpack.c.b16 %v1038, %v1035
    %v1312 = vpack.c.b16 %v1039, %v1036
    %v1313 = vpack.c.b16 %v1040, %v1037
    %v1314 = vpack.c.b16 %v1044, %v1041
    %v1315 = vpack.c.b16 %v1045, %v1042
    %v1316 = vpack.c.b16 %v1046, %v1043
    %v1317 = vpack.c.b16 %v1050, %v1047
    %v1318 = vpack.c.b16 %v1051, %v1048
    %v1319 = vpack.c.b16 %v1052, %v1049
    %v1320 = vpack.c.b16 %v1056, %v1053
    %v1321 = vpack.c.b16 %v1057, %v1054
    %v1322 = vpack.c.b16 %v1058, %v1055
    %v1323 = vpack.c.b16 %v1062, %v1059
    %v1324 = vpack.c.b16 %v1063, %v1060
    %v1325 = vpack.c.b16 %v1064, %v1061
    %v1326 = vpack.c.b16 %v1068, %v1065
    %v1327 = vpack.c.b16 %v1069, %v1066
    %v1328 = vpack.c.b16 %v1070, %v1067
    %v1329 = vpack.c.b16 %v1074, %v1071
    %v1330 = vpack.c.b16 %v1075, %v1072
    %v1331 = vpack.c.b16 %v1076, %v1073
    %v1332 = vpack.c.b16 %v1080, %v1077
    %v1333 = vpack.c.b16 %v1081, %v1078
    %v1334 = vpack.c.b16 %v1082, %v1079
    %v1335 = vpack.c.b16 %v1086, %v1083
    %v1336 = vpack.c.b16 %v1087, %v1084
    %v1337 = vpack.c.b16 %v1088, %v1085
    %v1338 = vpack.c.b16 %v1092, %v1089
    %v1339 = vpack.c.b16 %v1093, %v1090
    %v1340 = vpack.c.b16 %v1094, %v1091
    %v1341 = vpack.c.b16 %v1098, %v1095
    %v1342 = vpack.c.b16 %v1099, %v1096
    %v1343 = vpack.c.b16 %v1100, %v1097
    %v1344 = vpack.c.b16 %v1104, %v1101
    %v1345 = vpack.c.b16 %v1105, %v1102
    %v1346 = vpack.c.b16 %v1106, %v1103
    %v1347 = vpack.c.b16 %v1110, %v1107
    %v1348 = vpack.c.b16 %v1111, %v1108
    %v1349 = vpack.c.b16 %v1112, %v1109
    %v1350 = vpack.c.b16 %v1116, %v1113
    %v1351 = vpack.c.b16 %v1117, %v1114
    %v1352 = vpack.c.b16 %v1118, %v1115
    %v1353 = vpack.c.b16 %v1122, %v1119
    %v1354 = vpack.c.b16 %v1123, %v1120
    %v1355 = vpack.c.b16 %v1124, %v1121
    %v1356 = vpack.c.b16 %v1128, %v1125
    %v1357 = vpack.c.b16 %v1129, %v1126
    %v1358 = vpack.c.b16 %v1130, %v1127
    %v1359 = vpack.c.b16 %v1134, %v1131
    %v1360 = vpack.c.b16 %v1135, %v1132
    %v1361 = vpack.c.b16 %v1136, %v1133
    %v1362 = vpack.c.b16 %v1140, %v1137
    %v1363 = vpack.c.b16 %v1141, %v1138
    %v1364 = vpack.c.b16 %v1142, %v1139
    %v1365 = vpack.c.b16 %v1146, %v1143
    %v1366 = vpack.c.b16 %v1147, %v1144
    %v1367 = vpack.c.b16 %v1148, %v1145
    %v1368 = vpack.c.b16 %v1152, %v1149
    %v1369 = vpack.c.b16 %v1153, %v1150
    %v1370 = vpack.c.b16 %v1154, %v1151
    %1587 = vmatprep.subr.bf16.mxu0 %v1156
    %1588 = vmatpush1.bf16.msra.mxu0 %v1155
    %1589 = vmatprep.subr.bf16.mxu0 %v1159
    %1590 = vmatpush1.bf16.msra.mxu0 %v1158
    %1591 = vmatprep.subr.bf16.mxu0 %v1162
    %1592 = vmatpush1.bf16.msra.mxu0 %v1161
    %1593 = vmatprep.subr.bf16.mxu0 %v1165
    %1594 = vmatpush1.bf16.msra.mxu0 %v1164
    %1595 = vmatprep.subr.bf16.mxu0 %v1168
    %1596 = vmatpush1.bf16.msra.mxu0 %v1167
    %1597 = vmatprep.subr.bf16.mxu0 %v1171
    %1598 = vmatpush1.bf16.msra.mxu0 %v1170
    %1599 = vmatprep.subr.bf16.mxu0 %v1174
    %1600 = vmatpush1.bf16.msra.mxu0 %v1173
    %1601 = vmatprep.subr.bf16.mxu0 %v1177
    %1602 = vmatpush1.bf16.msra.mxu0 %v1176
    %1603 = vmatprep.subr.bf16.mxu0 %v1180
    %1604 = vmatpush1.bf16.msra.mxu0 %v1179
    %1605 = vmatprep.subr.bf16.mxu0 %v1183
    %1606 = vmatpush1.bf16.msra.mxu0 %v1182
    %1607 = vmatprep.subr.bf16.mxu0 %v1186
    %1608 = vmatpush1.bf16.msra.mxu0 %v1185
    %1609 = vmatprep.subr.bf16.mxu0 %v1189
    %1610 = vmatpush1.bf16.msra.mxu0 %v1188
    %1611 = vmatprep.subr.bf16.mxu0 %v1192
    %1612 = vmatpush1.bf16.msra.mxu0 %v1191
    %1613 = vmatprep.subr.bf16.mxu0 %v1195
    %1614 = vmatpush1.bf16.msra.mxu0 %v1194
    %1615 = vmatprep.subr.bf16.mxu0 %v1198
    %1616 = vmatpush1.bf16.msra.mxu0 %v1197
    %1617 = vmatprep.subr.bf16.mxu0 %v1201
    %1618 = vmatpush1.bf16.msra.mxu0 %v1200
    %1619 = vmatprep.mubr.bf16.mxu0 %v418
    %1620 = vmatmul.mubr.bf16.gmra.mrb[0].mxu0 %v417
    %v1621 = vpop.f32.mrb[0].mxu0
    %v1622 = vadd.f32 0.0, %v1621
    %v1623 = vpop.f32.mrb[0].mxu0
    %v1624 = vadd.f32 0.0, %v1623
    %v1625 = vpop.f32.mrb[0].mxu0
    %v1626 = vpop.f32.mrb[0].mxu0
    %1627 = vdwg.mxu0
    %1628 = vmatprep.subr.bf16.mxu0 %v1204
    %1629 = vmatpush1.bf16.msra.mxu0 %v1203
    %1630 = vmatprep.subr.bf16.mxu0 %v1207
    %1631 = vmatpush1.bf16.msra.mxu0 %v1206
    %1632 = vmatprep.subr.bf16.mxu0 %v1210
    %1633 = vmatpush1.bf16.msra.mxu0 %v1209
    %1634 = vmatprep.subr.bf16.mxu0 %v1213
    %1635 = vmatpush1.bf16.msra.mxu0 %v1212
    %1636 = vmatprep.subr.bf16.mxu0 %v1216
    %1637 = vmatpush1.bf16.msra.mxu0 %v1215
    %1638 = vmatprep.subr.bf16.mxu0 %v1219
    %1639 = vmatpush1.bf16.msra.mxu0 %v1218
    %1640 = vmatprep.subr.bf16.mxu0 %v1222
    %1641 = vmatpush1.bf16.msra.mxu0 %v1221
    %1642 = vmatprep.subr.bf16.mxu0 %v1225
    %1643 = vmatpush1.bf16.msra.mxu0 %v1224
    %1644 = vmatprep.subr.bf16.mxu0 %v1228
    %1645 = vmatpush1.bf16.msra.mxu0 %v1227
    %1646 = vmatprep.subr.bf16.mxu0 %v1231
    %1647 = vmatpush1.bf16.msra.mxu0 %v1230
    %1648 = vmatprep.subr.bf16.mxu0 %v1234
    %1649 = vmatpush1.bf16.msra.mxu0 %v1233
    %1650 = vmatprep.subr.bf16.mxu0 %v1237
    %1651 = vmatpush1.bf16.msra.mxu0 %v1236
    %1652 = vmatprep.subr.bf16.mxu0 %v1240
    %1653 = vmatpush1.bf16.msra.mxu0 %v1239
    %1654 = vmatprep.subr.bf16.mxu0 %v1243
    %1655 = vmatpush1.bf16.msra.mxu0 %v1242
    %1656 = vmatprep.subr.bf16.mxu0 %v1246
    %1657 = vmatpush1.bf16.msra.mxu0 %v1245
    %1658 = vmatprep.subr.bf16.mxu0 %v1249
    %1659 = vmatpush1.bf16.msra.mxu0 %v1248
    %1660 = vmatprep.mubr.bf16.mxu0 %v420
    %1661 = vmatmul.mubr.bf16.gmra.mrb[0].mxu0 %v419
    %v1662 = vpop.f32.mrb[0].mxu0
    %v1663 = vadd.f32 %v1622, %v1662
    %v1664 = vpop.f32.mrb[0].mxu0
    %v1665 = vadd.f32 %v1624, %v1664
    %v1666 = vpop.f32.mrb[0].mxu0
    %v1667 = vpop.f32.mrb[0].mxu0
    %1668 = vdwg.mxu0
    %1669 = vmatprep.subr.bf16.mxu0 %v1252
    %1670 = vmatpush1.bf16.msra.mxu0 %v1251
    %1671 = vmatprep.subr.bf16.mxu0 %v1255
    %1672 = vmatpush1.bf16.msra.mxu0 %v1254
    %1673 = vmatprep.subr.bf16.mxu0 %v1258
    %1674 = vmatpush1.bf16.msra.mxu0 %v1257
    %1675 = vmatprep.subr.bf16.mxu0 %v1261
    %1676 = vmatpush1.bf16.msra.mxu0 %v1260
    %1677 = vmatprep.subr.bf16.mxu0 %v1264
    %1678 = vmatpush1.bf16.msra.mxu0 %v1263
    %1679 = vmatprep.subr.bf16.mxu0 %v1267
    %1680 = vmatpush1.bf16.msra.mxu0 %v1266
    %1681 = vmatprep.subr.bf16.mxu0 %v1270
    %1682 = vmatpush1.bf16.msra.mxu0 %v1269
    %1683 = vmatprep.subr.bf16.mxu0 %v1273
    %1684 = vmatpush1.bf16.msra.mxu0 %v1272
    %1685 = vmatprep.subr.bf16.mxu0 %v1276
    %1686 = vmatpush1.bf16.msra.mxu0 %v1275
    %1687 = vmatprep.subr.bf16.mxu0 %v1279
    %1688 = vmatpush1.bf16.msra.mxu0 %v1278
    %1689 = vmatprep.subr.bf16.mxu0 %v1282
    %1690 = vmatpush1.bf16.msra.mxu0 %v1281
    %1691 = vmatprep.subr.bf16.mxu0 %v1285
    %1692 = vmatpush1.bf16.msra.mxu0 %v1284
    %1693 = vmatprep.subr.bf16.mxu0 %v1288
    %1694 = vmatpush1.bf16.msra.mxu0 %v1287
    %1695 = vmatprep.subr.bf16.mxu0 %v1291
    %1696 = vmatpush1.bf16.msra.mxu0 %v1290
    %1697 = vmatprep.subr.bf16.mxu0 %v1294
    %1698 = vmatpush1.bf16.msra.mxu0 %v1293
    %1699 = vmatprep.subr.bf16.mxu0 %v1297
    %1700 = vmatpush1.bf16.msra.mxu0 %v1296
    %1701 = vmatprep.mubr.bf16.mxu0 %v422
    %1702 = vmatmul.mubr.bf16.gmra.mrb[0].mxu0 %v421
    %v1703 = vpop.f32.mrb[0].mxu0
    %v1704 = vadd.f32 %v1663, %v1703
    %v1705 = vpop.f32.mrb[0].mxu0
    %v1706 = vadd.f32 %v1665, %v1705
    %v1707 = vpop.f32.mrb[0].mxu0
    %v1708 = vpop.f32.mrb[0].mxu0
    %1709 = vdwg.mxu0
    %1710 = vmatprep.subr.bf16.mxu0 %v1300
    %1711 = vmatpush1.bf16.msra.mxu0 %v1299
    %1712 = vmatprep.subr.bf16.mxu0 %v1303
    %1713 = vmatpush1.bf16.msra.mxu0 %v1302
    %1714 = vmatprep.subr.bf16.mxu0 %v1306
    %1715 = vmatpush1.bf16.msra.mxu0 %v1305
    %1716 = vmatprep.subr.bf16.mxu0 %v1309
    %1717 = vmatpush1.bf16.msra.mxu0 %v1308
    %1718 = vmatprep.subr.bf16.mxu0 %v1312
    %1719 = vmatpush1.bf16.msra.mxu0 %v1311
    %1720 = vmatprep.subr.bf16.mxu0 %v1315
    %1721 = vmatpush1.bf16.msra.mxu0 %v1314
    %1722 = vmatprep.subr.bf16.mxu0 %v1318
    %1723 = vmatpush1.bf16.msra.mxu0 %v1317
    %1724 = vmatprep.subr.bf16.mxu0 %v1321
    %1725 = vmatpush1.bf16.msra.mxu0 %v1320
    %1726 = vmatprep.subr.bf16.mxu0 %v1324
    %1727 = vmatpush1.bf16.msra.mxu0 %v1323
    %1728 = vmatprep.subr.bf16.mxu0 %v1327
    %1729 = vmatpush1.bf16.msra.mxu0 %v1326
    %1730 = vmatprep.subr.bf16.mxu0 %v1330
    %1731 = vmatpush1.bf16.msra.mxu0 %v1329
    %1732 = vmatprep.subr.bf16.mxu0 %v1333
    %1733 = vmatpush1.bf16.msra.mxu0 %v1332
    %1734 = vmatprep.subr.bf16.mxu0 %v1336
    %1735 = vmatpush1.bf16.msra.mxu0 %v1335
    %1736 = vmatprep.subr.bf16.mxu0 %v1339
    %1737 = vmatpush1.bf16.msra.mxu0 %v1338
    %1738 = vmatprep.subr.bf16.mxu0 %v1342
    %1739 = vmatpush1.bf16.msra.mxu0 %v1341
    %1740 = vmatprep.subr.bf16.mxu0 %v1345
    %1741 = vmatpush1.bf16.msra.mxu0 %v1344
    %1742 = vmatprep.mubr.bf16.mxu0 %v424
    %1743 = vmatmul.mubr.bf16.gmra.mrb[0].mxu0 %v423
    %v1744 = vpop.f32.mrb[0].mxu0
    %v1745 = vadd.f32 %v1704, %v1744
    %v1746 = vpop.f32.mrb[0].mxu0
    %v1747 = vadd.f32 %v1706, %v1746
    %v1748 = vpop.f32.mrb[0].mxu0
    %v1749 = vpop.f32.mrb[0].mxu0
    %1750 = vdwg.mxu0
    %1751 = vmatprep.subr.bf16.mxu0 %v1348
    %1752 = vmatpush1.bf16.msra.mxu0 %v1347
    %1753 = vmatprep.subr.bf16.mxu0 %v1351
    %1754 = vmatpush1.bf16.msra.mxu0 %v1350
    %1755 = vmatprep.subr.bf16.mxu0 %v1354
    %1756 = vmatpush1.bf16.msra.mxu0 %v1353
    %1757 = vmatprep.subr.bf16.mxu0 %v1357
    %1758 = vmatpush1.bf16.msra.mxu0 %v1356
    %1759 = vmatprep.subr.bf16.mxu0 %v1360
    %1760 = vmatpush1.bf16.msra.mxu0 %v1359
    %1761 = vmatprep.subr.bf16.mxu0 %v1363
    %1762 = vmatpush1.bf16.msra.mxu0 %v1362
    %1763 = vmatprep.subr.bf16.mxu0 %v1366
    %1764 = vmatpush1.bf16.msra.mxu0 %v1365
    %1765 = vmatprep.subr.bf16.mxu0 %v1369
    %1766 = vmatpush1.bf16.msra.mxu0 %v1368
    %1767 = vmatprep.subr.bf16.mxu0 0
    %1768 = vmatpush1.bf16.msra.mxu0 0
    %1769 = vmatprep.subr.bf16.mxu0 0
    %1770 = vmatpush1.bf16.msra.mxu0 0
    %1771 = vmatprep.subr.bf16.mxu0 0
    %1772 = vmatpush1.bf16.msra.mxu0 0
    %1773 = vmatprep.subr.bf16.mxu0 0
    %1774 = vmatpush1.bf16.msra.mxu0 0
    %1775 = vmatprep.subr.bf16.mxu0 0
    %1776 = vmatpush1.bf16.msra.mxu0 0
    %1777 = vmatprep.subr.bf16.mxu0 0
    %1778 = vmatpush1.bf16.msra.mxu0 0
    %1779 = vmatprep.subr.bf16.mxu0 0
    %1780 = vmatpush1.bf16.msra.mxu0 0
    %1781 = vmatprep.subr.bf16.mxu0 0
    %1782 = vmatpush1.bf16.msra.mxu0 0
    %1783 = vmatprep.mubr.bf16.mxu0 0
    %1784 = vmatmul.mubr.bf16.gmra.mrb[0].mxu0 %v425
    %v1785 = vpop.f32.mrb[0].mxu0
    %v1786 = vadd.f32 %v1745, %v1785
    %v1787 = vpop.f32.mrb[0].mxu0
    %v1788 = vadd.f32 %v1747, %v1787
    %v1789 = vpop.f32.mrb[0].mxu0
    %v1790 = vpop.f32.mrb[0].mxu0
    %1791 = vdwg.mxu0
    %1792 = vmatprep.subr.bf16.mxu0 0
    %1793 = vmatpush1.bf16.msra.mxu0 %v1157
    %1794 = vmatprep.subr.bf16.mxu0 0
    %1795 = vmatpush1.bf16.msra.mxu0 %v1160
    %1796 = vmatprep.subr.bf16.mxu0 0
    %1797 = vmatpush1.bf16.msra.mxu0 %v1163
    %1798 = vmatprep.subr.bf16.mxu0 0
    %1799 = vmatpush1.bf16.msra.mxu0 %v1166
    %1800 = vmatprep.subr.bf16.mxu0 0
    %1801 = vmatpush1.bf16.msra.mxu0 %v1169
    %1802 = vmatprep.subr.bf16.mxu0 0
    %1803 = vmatpush1.bf16.msra.mxu0 %v1172
    %1804 = vmatprep.subr.bf16.mxu0 0
    %1805 = vmatpush1.bf16.msra.mxu0 %v1175
    %1806 = vmatprep.subr.bf16.mxu0 0
    %1807 = vmatpush1.bf16.msra.mxu0 %v1178
    %1808 = vmatprep.subr.bf16.mxu0 0
    %1809 = vmatpush1.bf16.msra.mxu0 %v1181
    %1810 = vmatprep.subr.bf16.mxu0 0
    %1811 = vmatpush1.bf16.msra.mxu0 %v1184
    %1812 = vmatprep.subr.bf16.mxu0 0
    %1813 = vmatpush1.bf16.msra.mxu0 %v1187
    %1814 = vmatprep.subr.bf16.mxu0 0
    %1815 = vmatpush1.bf16.msra.mxu0 %v1190
    %1816 = vmatprep.subr.bf16.mxu0 0
    %1817 = vmatpush1.bf16.msra.mxu0 %v1193
    %1818 = vmatprep.subr.bf16.mxu0 0
    %1819 = vmatpush1.bf16.msra.mxu0 %v1196
    %1820 = vmatprep.subr.bf16.mxu0 0
    %1821 = vmatpush1.bf16.msra.mxu0 %v1199
    %1822 = vmatprep.subr.bf16.mxu0 0
    %1823 = vmatpush1.bf16.msra.mxu0 %v1202
    %1824 = vmatprep.mubr.bf16.mxu0 %v418
    %1825 = vmatmul.mubr.bf16.gmra.mrb[0].mxu0 %v417
    %v1826 = vpop.f32.mrb[0].mxu0
    %v1827 = vadd.f32 0.0, %v1826
    %v1828 = vpop.f32.mrb[0].mxu0
    %v1829 = vpop.f32.mrb[0].mxu0
    %v1830 = vpop.f32.mrb[0].mxu0
    %1831 = vdwg.mxu0
    %1832 = vmatprep.subr.bf16.mxu0 0
    %1833 = vmatpush1.bf16.msra.mxu0 %v1205
    %1834 = vmatprep.subr.bf16.mxu0 0
    %1835 = vmatpush1.bf16.msra.mxu0 %v1208
    %1836 = vmatprep.subr.bf16.mxu0 0
    %1837 = vmatpush1.bf16.msra.mxu0 %v1211
    %1838 = vmatprep.subr.bf16.mxu0 0
    %1839 = vmatpush1.bf16.msra.mxu0 %v1214
    %1840 = vmatprep.subr.bf16.mxu0 0
    %1841 = vmatpush1.bf16.msra.mxu0 %v1217
    %1842 = vmatprep.subr.bf16.mxu0 0
    %1843 = vmatpush1.bf16.msra.mxu0 %v1220
    %1844 = vmatprep.subr.bf16.mxu0 0
    %1845 = vmatpush1.bf16.msra.mxu0 %v1223
    %1846 = vmatprep.subr.bf16.mxu0 0
    %1847 = vmatpush1.bf16.msra.mxu0 %v1226
    %1848 = vmatprep.subr.bf16.mxu0 0
    %1849 = vmatpush1.bf16.msra.mxu0 %v1229
    %1850 = vmatprep.subr.bf16.mxu0 0
    %1851 = vmatpush1.bf16.msra.mxu0 %v1232
    %1852 = vmatprep.subr.bf16.mxu0 0
    %1853 = vmatpush1.bf16.msra.mxu0 %v1235
    %1854 = vmatprep.subr.bf16.mxu0 0
    %1855 = vmatpush1.bf16.msra.mxu0 %v1238
    %1856 = vmatprep.subr.bf16.mxu0 0
    %1857 = vmatpush1.bf16.msra.mxu0 %v1241
    %1858 = vmatprep.subr.bf16.mxu0 0
    %1859 = vmatpush1.bf16.msra.mxu0 %v1244
    %1860 = vmatprep.subr.bf16.mxu0 0
    %1861 = vmatpush1.bf16.msra.mxu0 %v1247
    %1862 = vmatprep.subr.bf16.mxu0 0
    %1863 = vmatpush1.bf16.msra.mxu0 %v1250
    %1864 = vmatprep.mubr.bf16.mxu0 %v420
    %1865 = vmatmul.mubr.bf16.gmra.mrb[0].mxu0 %v419
    %v1866 = vpop.f32.mrb[0].mxu0
    %v1867 = vadd.f32 %v1827, %v1866
    %v1868 = vpop.f32.mrb[0].mxu0
    %v1869 = vpop.f32.mrb[0].mxu0
    %v1870 = vpop.f32.mrb[0].mxu0
    %1871 = vdwg.mxu0
    %1872 = vmatprep.subr.bf16.mxu0 0
    %1873 = vmatpush1.bf16.msra.mxu0 %v1253
    %1874 = vmatprep.subr.bf16.mxu0 0
    %1875 = vmatpush1.bf16.msra.mxu0 %v1256
    %1876 = vmatprep.subr.bf16.mxu0 0
    %1877 = vmatpush1.bf16.msra.mxu0 %v1259
    %1878 = vmatprep.subr.bf16.mxu0 0
    %1879 = vmatpush1.bf16.msra.mxu0 %v1262
    %1880 = vmatprep.subr.bf16.mxu0 0
    %1881 = vmatpush1.bf16.msra.mxu0 %v1265
    %1882 = vmatprep.subr.bf16.mxu0 0
    %1883 = vmatpush1.bf16.msra.mxu0 %v1268
    %1884 = vmatprep.subr.bf16.mxu0 0
    %1885 = vmatpush1.bf16.msra.mxu0 %v1271
    %1886 = vmatprep.subr.bf16.mxu0 0
    %1887 = vmatpush1.bf16.msra.mxu0 %v1274
    %1888 = vmatprep.subr.bf16.mxu0 0
    %1889 = vmatpush1.bf16.msra.mxu0 %v1277
    %1890 = vmatprep.subr.bf16.mxu0 0
    %1891 = vmatpush1.bf16.msra.mxu0 %v1280
    %1892 = vmatprep.subr.bf16.mxu0 0
    %1893 = vmatpush1.bf16.msra.mxu0 %v1283
    %1894 = vmatprep.subr.bf16.mxu0 0
    %1895 = vmatpush1.bf16.msra.mxu0 %v1286
    %1896 = vmatprep.subr.bf16.mxu0 0
    %1897 = vmatpush1.bf16.msra.mxu0 %v1289
    %1898 = vmatprep.subr.bf16.mxu0 0
    %1899 = vmatpush1.bf16.msra.mxu0 %v1292
    %1900 = vmatprep.subr.bf16.mxu0 0
    %1901 = vmatpush1.bf16.msra.mxu0 %v1295
    %1902 = vmatprep.subr.bf16.mxu0 0
    %1903 = vmatpush1.bf16.msra.mxu0 %v1298
    %1904 = vmatprep.mubr.bf16.mxu0 %v422
    %1905 = vmatmul.mubr.bf16.gmra.mrb[0].mxu0 %v421
    %v1906 = vpop.f32.mrb[0].mxu0
    %v1907 = vadd.f32 %v1867, %v1906
    %v1908 = vpop.f32.mrb[0].mxu0
    %v1909 = vpop.f32.mrb[0].mxu0
    %v1910 = vpop.f32.mrb[0].mxu0
    %1911 = vdwg.mxu0
    %1912 = vmatprep.subr.bf16.mxu0 0
    %1913 = vmatpush1.bf16.msra.mxu0 %v1301
    %1914 = vmatprep.subr.bf16.mxu0 0
    %1915 = vmatpush1.bf16.msra.mxu0 %v1304
    %1916 = vmatprep.subr.bf16.mxu0 0
    %1917 = vmatpush1.bf16.msra.mxu0 %v1307
    %1918 = vmatprep.subr.bf16.mxu0 0
    %1919 = vmatpush1.bf16.msra.mxu0 %v1310
    %1920 = vmatprep.subr.bf16.mxu0 0
    %1921 = vmatpush1.bf16.msra.mxu0 %v1313
    %1922 = vmatprep.subr.bf16.mxu0 0
    %1923 = vmatpush1.bf16.msra.mxu0 %v1316
    %1924 = vmatprep.subr.bf16.mxu0 0
    %1925 = vmatpush1.bf16.msra.mxu0 %v1319
    %1926 = vmatprep.subr.bf16.mxu0 0
    %1927 = vmatpush1.bf16.msra.mxu0 %v1322
    %1928 = vmatprep.subr.bf16.mxu0 0
    %1929 = vmatpush1.bf16.msra.mxu0 %v1325
    %1930 = vmatprep.subr.bf16.mxu0 0
    %1931 = vmatpush1.bf16.msra.mxu0 %v1328
    %1932 = vmatprep.subr.bf16.mxu0 0
    %1933 = vmatpush1.bf16.msra.mxu0 %v1331
    %1934 = vmatprep.subr.bf16.mxu0 0
    %1935 = vmatpush1.bf16.msra.mxu0 %v1334
    %1936 = vmatprep.subr.bf16.mxu0 0
    %1937 = vmatpush1.bf16.msra.mxu0 %v1337
    %1938 = vmatprep.subr.bf16.mxu0 0
    %1939 = vmatpush1.bf16.msra.mxu0 %v1340
    %1940 = vmatprep.subr.bf16.mxu0 0
    %1941 = vmatpush1.bf16.msra.mxu0 %v1343
    %1942 = vmatprep.subr.bf16.mxu0 0
    %1943 = vmatpush1.bf16.msra.mxu0 %v1346
    %1944 = vmatprep.mubr.bf16.mxu0 %v424
    %1945 = vmatmul.mubr.bf16.gmra.mrb[0].mxu0 %v423
    %v1946 = vpop.f32.mrb[0].mxu0
    %v1947 = vadd.f32 %v1907, %v1946
    %v1948 = vpop.f32.mrb[0].mxu0
    %v1949 = vpop.f32.mrb[0].mxu0
    %v1950 = vpop.f32.mrb[0].mxu0
    %1951 = vdwg.mxu0
    %1952 = vmatprep.subr.bf16.mxu0 0
    %1953 = vmatpush1.bf16.msra.mxu0 %v1349
    %1954 = vmatprep.subr.bf16.mxu0 0
    %1955 = vmatpush1.bf16.msra.mxu0 %v1352
    %1956 = vmatprep.subr.bf16.mxu0 0
    %1957 = vmatpush1.bf16.msra.mxu0 %v1355
    %1958 = vmatprep.subr.bf16.mxu0 0
    %1959 = vmatpush1.bf16.msra.mxu0 %v1358
    %1960 = vmatprep.subr.bf16.mxu0 0
    %1961 = vmatpush1.bf16.msra.mxu0 %v1361
    %1962 = vmatprep.subr.bf16.mxu0 0
    %1963 = vmatpush1.bf16.msra.mxu0 %v1364
    %1964 = vmatprep.subr.bf16.mxu0 0
    %1965 = vmatpush1.bf16.msra.mxu0 %v1367
    %1966 = vmatprep.subr.bf16.mxu0 0
    %1967 = vmatpush1.bf16.msra.mxu0 %v1370
    %1968 = vmatprep.subr.bf16.mxu0 0
    %1969 = vmatpush1.bf16.msra.mxu0 0
    %1970 = vmatprep.subr.bf16.mxu0 0
    %1971 = vmatpush1.bf16.msra.mxu0 0
    %1972 = vmatprep.subr.bf16.mxu0 0
    %1973 = vmatpush1.bf16.msra.mxu0 0
    %1974 = vmatprep.subr.bf16.mxu0 0
    %1975 = vmatpush1.bf16.msra.mxu0 0
    %1976 = vmatprep.subr.bf16.mxu0 0
    %1977 = vmatpush1.bf16.msra.mxu0 0
    %1978 = vmatprep.subr.bf16.mxu0 0
    %1979 = vmatpush1.bf16.msra.mxu0 0
    %1980 = vmatprep.subr.bf16.mxu0 0
    %1981 = vmatpush1.bf16.msra.mxu0 0
    %1982 = vmatprep.subr.bf16.mxu0 0
    %1983 = vmatpush1.bf16.msra.mxu0 0
    %1984 = vmatprep.mubr.bf16.mxu0 0
    %1985 = vmatmul.mubr.bf16.gmra.mrb[0].mxu0 %v425
    %v1986 = vpop.f32.mrb[0].mxu0
    %v1987 = vadd.f32 %v1947, %v1986
    %v1988 = vpop.f32.mrb[0].mxu0
    %v1989 = vpop.f32.mrb[0].mxu0
    %v1990 = vpop.f32.mrb[0].mxu0
    %1991 = vdwg.mxu0
    %vm1992 = vcmp.gt.f32.partialorder %v1786, 0.0
    %vm1993 = vcmp.gt.f32.partialorder %v1788, 0.0
    %vm1994 = vcmp.gt.f32.partialorder %v1987, 0.0
    %v1995 = vmul.f32 %v1786, 0.2
    %v1996 = vmul.f32 %v1788, 0.2
    %v1997 = vmul.f32 %v1987, 0.2
    %v1998 = vsel %vm1992, %v1786, %v1995
    %v1999 = vsel %vm1993, %v1788, %v1996
    %v2000 = vsel %vm1994, %v1987, %v1997
    %v2006 = vunpack.c.l.b16 %v40
    %v2007 = vunpack.c.h.b16 %v40
    %v2008 = vunpack.c.l.b16 %v41
    %v2009 = vunpack.c.h.b16 %v41
    %v2010 = vunpack.c.l.b16 %v42
    %v2011 = vunpack.c.h.b16 %v42
    %v2012 = vunpack.c.l.b16 %v43
    %v2013 = vunpack.c.h.b16 %v43
    %v2014 = vunpack.c.l.b16 %v44
    %v2015 = vpack.c.b16 %v2006, %v2006
    %v2016 = vpack.c.b16 %v2007, %v2007
    %v2017 = vpack.c.b16 %v2008, %v2008
    %v2018 = vpack.c.b16 %v2009, %v2009
    %v2019 = vpack.c.b16 %v2010, %v2010
    %v2020 = vpack.c.b16 %v2011, %v2011
    %v2021 = vpack.c.b16 %v2012, %v2012
    %v2022 = vpack.c.b16 %v2013, %v2013
    %v2023 = vpack.c.b16 %v2014, %v2014
    %2033 = vmatprep.subr.bf16.mxu0 %v1156
    %2034 = vmatpush1.bf16.msra.mxu0 %v1155
    %2035 = vmatprep.subr.bf16.mxu0 %v1159
    %2036 = vmatpush1.bf16.msra.mxu0 %v1158
    %2037 = vmatprep.subr.bf16.mxu0 %v1162
    %2038 = vmatpush1.bf16.msra.mxu0 %v1161
    %2039 = vmatprep.subr.bf16.mxu0 %v1165
    %2040 = vmatpush1.bf16.msra.mxu0 %v1164
    %2041 = vmatprep.subr.bf16.mxu0 %v1168
    %2042 = vmatpush1.bf16.msra.mxu0 %v1167
    %2043 = vmatprep.subr.bf16.mxu0 %v1171
    %2044 = vmatpush1.bf16.msra.mxu0 %v1170
    %2045 = vmatprep.subr.bf16.mxu0 %v1174
    %2046 = vmatpush1.bf16.msra.mxu0 %v1173
    %2047 = vmatprep.subr.bf16.mxu0 %v1177
    %2048 = vmatpush1.bf16.msra.mxu0 %v1176
    %2049 = vmatprep.subr.bf16.mxu0 %v1180
    %2050 = vmatpush1.bf16.msra.mxu0 %v1179
    %2051 = vmatprep.subr.bf16.mxu0 %v1183
    %2052 = vmatpush1.bf16.msra.mxu0 %v1182
    %2053 = vmatprep.subr.bf16.mxu0 %v1186
    %2054 = vmatpush1.bf16.msra.mxu0 %v1185
    %2055 = vmatprep.subr.bf16.mxu0 %v1189
    %2056 = vmatpush1.bf16.msra.mxu0 %v1188
    %2057 = vmatprep.subr.bf16.mxu0 %v1192
    %2058 = vmatpush1.bf16.msra.mxu0 %v1191
    %2059 = vmatprep.subr.bf16.mxu0 %v1195
    %2060 = vmatpush1.bf16.msra.mxu0 %v1194
    %2061 = vmatprep.subr.bf16.mxu0 %v1198
    %2062 = vmatpush1.bf16.msra.mxu0 %v1197
    %2063 = vmatprep.subr.bf16.mxu0 %v1201
    %2064 = vmatpush1.bf16.msra.mxu0 %v1200
    %2065 = vmatprep.mubr.bf16.mxu0 %v2016
    %2066 = vmatmul.mubr.bf16.gmra.mrb[0].mxu0 %v2015
    %v2067 = vpop.f32.mrb[0].mxu0
    %v2068 = vadd.f32 0.0, %v2067
    %v2069 = vpop.f32.mrb[0].mxu0
    %v2070 = vadd.f32 0.0, %v2069
    %v2071 = vpop.f32.mrb[0].mxu0
    %v2072 = vpop.f32.mrb[0].mxu0
    %2073 = vdwg.mxu0
    %2074 = vmatprep.subr.bf16.mxu0 %v1204
    %2075 = vmatpush1.bf16.msra.mxu0 %v1203
    %2076 = vmatprep.subr.bf16.mxu0 %v1207
    %2077 = vmatpush1.bf16.msra.mxu0 %v1206
    %2078 = vmatprep.subr.bf16.mxu0 %v1210
    %2079 = vmatpush1.bf16.msra.mxu0 %v1209
    %2080 = vmatprep.subr.bf16.mxu0 %v1213
    %2081 = vmatpush1.bf16.msra.mxu0 %v1212
    %2082 = vmatprep.subr.bf16.mxu0 %v1216
    %2083 = vmatpush1.bf16.msra.mxu0 %v1215
    %2084 = vmatprep.subr.bf16.mxu0 %v1219
    %2085 = vmatpush1.bf16.msra.mxu0 %v1218
    %2086 = vmatprep.subr.bf16.mxu0 %v1222
    %2087 = vmatpush1.bf16.msra.mxu0 %v1221
    %2088 = vmatprep.subr.bf16.mxu0 %v1225
    %2089 = vmatpush1.bf16.msra.mxu0 %v1224
    %2090 = vmatprep.subr.bf16.mxu0 %v1228
    %2091 = vmatpush1.bf16.msra.mxu0 %v1227
    %2092 = vmatprep.subr.bf16.mxu0 %v1231
    %2093 = vmatpush1.bf16.msra.mxu0 %v1230
    %2094 = vmatprep.subr.bf16.mxu0 %v1234
    %2095 = vmatpush1.bf16.msra.mxu0 %v1233
    %2096 = vmatprep.subr.bf16.mxu0 %v1237
    %2097 = vmatpush1.bf16.msra.mxu0 %v1236
    %2098 = vmatprep.subr.bf16.mxu0 %v1240
    %2099 = vmatpush1.bf16.msra.mxu0 %v1239
    %2100 = vmatprep.subr.bf16.mxu0 %v1243
    %2101 = vmatpush1.bf16.msra.mxu0 %v1242
    %2102 = vmatprep.subr.bf16.mxu0 %v1246
    %2103 = vmatpush1.bf16.msra.mxu0 %v1245
    %2104 = vmatprep.subr.bf16.mxu0 %v1249
    %2105 = vmatpush1.bf16.msra.mxu0 %v1248
    %2106 = vmatprep.mubr.bf16.mxu0 %v2018
    %2107 = vmatmul.mubr.bf16.gmra.mrb[0].mxu0 %v2017
    %v2108 = vpop.f32.mrb[0].mxu0
    %v2109 = vadd.f32 %v2068, %v2108
    %v2110 = vpop.f32.mrb[0].mxu0
    %v2111 = vadd.f32 %v2070, %v2110
    %v2112 = vpop.f32.mrb[0].mxu0
    %v2113 = vpop.f32.mrb[0].mxu0
    %2114 = vdwg.mxu0
    %2115 = vmatprep.subr.bf16.mxu0 %v1252
    %2116 = vmatpush1.bf16.msra.mxu0 %v1251
    %2117 = vmatprep.subr.bf16.mxu0 %v1255
    %2118 = vmatpush1.bf16.msra.mxu0 %v1254
    %2119 = vmatprep.subr.bf16.mxu0 %v1258
    %2120 = vmatpush1.bf16.msra.mxu0 %v1257
    %2121 = vmatprep.subr.bf16.mxu0 %v1261
    %2122 = vmatpush1.bf16.msra.mxu0 %v1260
    %2123 = vmatprep.subr.bf16.mxu0 %v1264
    %2124 = vmatpush1.bf16.msra.mxu0 %v1263
    %2125 = vmatprep.subr.bf16.mxu0 %v1267
    %2126 = vmatpush1.bf16.msra.mxu0 %v1266
    %2127 = vmatprep.subr.bf16.mxu0 %v1270
    %2128 = vmatpush1.bf16.msra.mxu0 %v1269
    %2129 = vmatprep.subr.bf16.mxu0 %v1273
    %2130 = vmatpush1.bf16.msra.mxu0 %v1272
    %2131 = vmatprep.subr.bf16.mxu0 %v1276
    %2132 = vmatpush1.bf16.msra.mxu0 %v1275
    %2133 = vmatprep.subr.bf16.mxu0 %v1279
    %2134 = vmatpush1.bf16.msra.mxu0 %v1278
    %2135 = vmatprep.subr.bf16.mxu0 %v1282
    %2136 = vmatpush1.bf16.msra.mxu0 %v1281
    %2137 = vmatprep.subr.bf16.mxu0 %v1285
    %2138 = vmatpush1.bf16.msra.mxu0 %v1284
    %2139 = vmatprep.subr.bf16.mxu0 %v1288
    %2140 = vmatpush1.bf16.msra.mxu0 %v1287
    %2141 = vmatprep.subr.bf16.mxu0 %v1291
    %2142 = vmatpush1.bf16.msra.mxu0 %v1290
    %2143 = vmatprep.subr.bf16.mxu0 %v1294
    %2144 = vmatpush1.bf16.msra.mxu0 %v1293
    %2145 = vmatprep.subr.bf16.mxu0 %v1297
    %2146 = vmatpush1.bf16.msra.mxu0 %v1296
    %2147 = vmatprep.mubr.bf16.mxu0 %v2020
    %2148 = vmatmul.mubr.bf16.gmra.mrb[0].mxu0 %v2019
    %v2149 = vpop.f32.mrb[0].mxu0
    %v2150 = vadd.f32 %v2109, %v2149
    %v2151 = vpop.f32.mrb[0].mxu0
    %v2152 = vadd.f32 %v2111, %v2151
    %v2153 = vpop.f32.mrb[0].mxu0
    %v2154 = vpop.f32.mrb[0].mxu0
    %2155 = vdwg.mxu0
    %2156 = vmatprep.subr.bf16.mxu0 %v1300
    %2157 = vmatpush1.bf16.msra.mxu0 %v1299
    %2158 = vmatprep.subr.bf16.mxu0 %v1303
    %2159 = vmatpush1.bf16.msra.mxu0 %v1302
    %2160 = vmatprep.subr.bf16.mxu0 %v1306
    %2161 = vmatpush1.bf16.msra.mxu0 %v1305
    %2162 = vmatprep.subr.bf16.mxu0 %v1309
    %2163 = vmatpush1.bf16.msra.mxu0 %v1308
    %2164 = vmatprep.subr.bf16.mxu0 %v1312
    %2165 = vmatpush1.bf16.msra.mxu0 %v1311
    %2166 = vmatprep.subr.bf16.mxu0 %v1315
    %2167 = vmatpush1.bf16.msra.mxu0 %v1314
    %2168 = vmatprep.subr.bf16.mxu0 %v1318
    %2169 = vmatpush1.bf16.msra.mxu0 %v1317
    %2170 = vmatprep.subr.bf16.mxu0 %v1321
    %2171 = vmatpush1.bf16.msra.mxu0 %v1320
    %2172 = vmatprep.subr.bf16.mxu0 %v1324
    %2173 = vmatpush1.bf16.msra.mxu0 %v1323
    %2174 = vmatprep.subr.bf16.mxu0 %v1327
    %2175 = vmatpush1.bf16.msra.mxu0 %v1326
    %2176 = vmatprep.subr.bf16.mxu0 %v1330
    %2177 = vmatpush1.bf16.msra.mxu0 %v1329
    %2178 = vmatprep.subr.bf16.mxu0 %v1333
    %2179 = vmatpush1.bf16.msra.mxu0 %v1332
    %2180 = vmatprep.subr.bf16.mxu0 %v1336
    %2181 = vmatpush1.bf16.msra.mxu0 %v1335
    %2182 = vmatprep.subr.bf16.mxu0 %v1339
    %2183 = vmatpush1.bf16.msra.mxu0 %v1338
    %2184 = vmatprep.subr.bf16.mxu0 %v1342
    %2185 = vmatpush1.bf16.msra.mxu0 %v1341
    %2186 = vmatprep.subr.bf16.mxu0 %v1345
    %2187 = vmatpush1.bf16.msra.mxu0 %v1344
    %2188 = vmatprep.mubr.bf16.mxu0 %v2022
    %2189 = vmatmul.mubr.bf16.gmra.mrb[0].mxu0 %v2021
    %v2190 = vpop.f32.mrb[0].mxu0
    %v2191 = vadd.f32 %v2150, %v2190
    %v2192 = vpop.f32.mrb[0].mxu0
    %v2193 = vadd.f32 %v2152, %v2192
    %v2194 = vpop.f32.mrb[0].mxu0
    %v2195 = vpop.f32.mrb[0].mxu0
    %2196 = vdwg.mxu0
    %2197 = vmatprep.subr.bf16.mxu0 %v1348
    %2198 = vmatpush1.bf16.msra.mxu0 %v1347
    %2199 = vmatprep.subr.bf16.mxu0 %v1351
    %2200 = vmatpush1.bf16.msra.mxu0 %v1350
    %2201 = vmatprep.subr.bf16.mxu0 %v1354
    %2202 = vmatpush1.bf16.msra.mxu0 %v1353
    %2203 = vmatprep.subr.bf16.mxu0 %v1357
    %2204 = vmatpush1.bf16.msra.mxu0 %v1356
    %2205 = vmatprep.subr.bf16.mxu0 %v1360
    %2206 = vmatpush1.bf16.msra.mxu0 %v1359
    %2207 = vmatprep.subr.bf16.mxu0 %v1363
    %2208 = vmatpush1.bf16.msra.mxu0 %v1362
    %2209 = vmatprep.subr.bf16.mxu0 %v1366
    %2210 = vmatpush1.bf16.msra.mxu0 %v1365
    %2211 = vmatprep.subr.bf16.mxu0 %v1369
    %2212 = vmatpush1.bf16.msra.mxu0 %v1368
    %2213 = vmatprep.subr.bf16.mxu0 0
    %2214 = vmatpush1.bf16.msra.mxu0 0
    %2215 = vmatprep.subr.bf16.mxu0 0
    %2216 = vmatpush1.bf16.msra.mxu0 0
    %2217 = vmatprep.subr.bf16.mxu0 0
    %2218 = vmatpush1.bf16.msra.mxu0 0
    %2219 = vmatprep.subr.bf16.mxu0 0
    %2220 = vmatpush1.bf16.msra.mxu0 0
    %2221 = vmatprep.subr.bf16.mxu0 0
    %2222 = vmatpush1.bf16.msra.mxu0 0
    %2223 = vmatprep.subr.bf16.mxu0 0
    %2224 = vmatpush1.bf16.msra.mxu0 0
    %2225 = vmatprep.subr.bf16.mxu0 0
    %2226 = vmatpush1.bf16.msra.mxu0 0
    %2227 = vmatprep.subr.bf16.mxu0 0
    %2228 = vmatpush1.bf16.msra.mxu0 0
    %2229 = vmatprep.mubr.bf16.mxu0 0
    %2230 = vmatmul.mubr.bf16.gmra.mrb[0].mxu0 %v2023
    %v2231 = vpop.f32.mrb[0].mxu0
    %v2232 = vadd.f32 %v2191, %v2231
    %v2233 = vpop.f32.mrb[0].mxu0
    %v2234 = vadd.f32 %v2193, %v2233
    %v2235 = vpop.f32.mrb[0].mxu0
    %v2236 = vpop.f32.mrb[0].mxu0
    %2237 = vdwg.mxu0
    %2238 = vmatprep.subr.bf16.mxu0 0
    %2239 = vmatpush1.bf16.msra.mxu0 %v1157
    %2240 = vmatprep.subr.bf16.mxu0 0
    %2241 = vmatpush1.bf16.msra.mxu0 %v1160
    %2242 = vmatprep.subr.bf16.mxu0 0
    %2243 = vmatpush1.bf16.msra.mxu0 %v1163
    %2244 = vmatprep.subr.bf16.mxu0 0
    %2245 = vmatpush1.bf16.msra.mxu0 %v1166
    %2246 = vmatprep.subr.bf16.mxu0 0
    %2247 = vmatpush1.bf16.msra.mxu0 %v1169
    %2248 = vmatprep.subr.bf16.mxu0 0
    %2249 = vmatpush1.bf16.msra.mxu0 %v1172
    %2250 = vmatprep.subr.bf16.mxu0 0
    %2251 = vmatpush1.bf16.msra.mxu0 %v1175
    %2252 = vmatprep.subr.bf16.mxu0 0
    %2253 = vmatpush1.bf16.msra.mxu0 %v1178
    %2254 = vmatprep.subr.bf16.mxu0 0
    %2255 = vmatpush1.bf16.msra.mxu0 %v1181
    %2256 = vmatprep.subr.bf16.mxu0 0
    %2257 = vmatpush1.bf16.msra.mxu0 %v1184
    %2258 = vmatprep.subr.bf16.mxu0 0
    %2259 = vmatpush1.bf16.msra.mxu0 %v1187
    %2260 = vmatprep.subr.bf16.mxu0 0
    %2261 = vmatpush1.bf16.msra.mxu0 %v1190
    %2262 = vmatprep.subr.bf16.mxu0 0
    %2263 = vmatpush1.bf16.msra.mxu0 %v1193
    %2264 = vmatprep.subr.bf16.mxu0 0
    %2265 = vmatpush1.bf16.msra.mxu0 %v1196
    %2266 = vmatprep.subr.bf16.mxu0 0
    %2267 = vmatpush1.bf16.msra.mxu0 %v1199
    %2268 = vmatprep.subr.bf16.mxu0 0
    %2269 = vmatpush1.bf16.msra.mxu0 %v1202
    %2270 = vmatprep.mubr.bf16.mxu0 %v2016
    %2271 = vmatmul.mubr.bf16.gmra.mrb[0].mxu0 %v2015
    %v2272 = vpop.f32.mrb[0].mxu0
    %v2273 = vadd.f32 0.0, %v2272
    %v2274 = vpop.f32.mrb[0].mxu0
    %v2275 = vpop.f32.mrb[0].mxu0
    %v2276 = vpop.f32.mrb[0].mxu0
    %2277 = vdwg.mxu0
    %2278 = vmatprep.subr.bf16.mxu0 0
    %2279 = vmatpush1.bf16.msra.mxu0 %v1205
    %2280 = vmatprep.subr.bf16.mxu0 0
    %2281 = vmatpush1.bf16.msra.mxu0 %v1208
    %2282 = vmatprep.subr.bf16.mxu0 0
    %2283 = vmatpush1.bf16.msra.mxu0 %v1211
    %2284 = vmatprep.subr.bf16.mxu0 0
    %2285 = vmatpush1.bf16.msra.mxu0 %v1214
    %2286 = vmatprep.subr.bf16.mxu0 0
    %2287 = vmatpush1.bf16.msra.mxu0 %v1217
    %2288 = vmatprep.subr.bf16.mxu0 0
    %2289 = vmatpush1.bf16.msra.mxu0 %v1220
    %2290 = vmatprep.subr.bf16.mxu0 0
    %2291 = vmatpush1.bf16.msra.mxu0 %v1223
    %2292 = vmatprep.subr.bf16.mxu0 0
    %2293 = vmatpush1.bf16.msra.mxu0 %v1226
    %2294 = vmatprep.subr.bf16.mxu0 0
    %2295 = vmatpush1.bf16.msra.mxu0 %v1229
    %2296 = vmatprep.subr.bf16.mxu0 0
    %2297 = vmatpush1.bf16.msra.mxu0 %v1232
    %2298 = vmatprep.subr.bf16.mxu0 0
    %2299 = vmatpush1.bf16.msra.mxu0 %v1235
    %2300 = vmatprep.subr.bf16.mxu0 0
    %2301 = vmatpush1.bf16.msra.mxu0 %v1238
    %2302 = vmatprep.subr.bf16.mxu0 0
    %2303 = vmatpush1.bf16.msra.mxu0 %v1241
    %2304 = vmatprep.subr.bf16.mxu0 0
    %2305 = vmatpush1.bf16.msra.mxu0 %v1244
    %2306 = vmatprep.subr.bf16.mxu0 0
    %2307 = vmatpush1.bf16.msra.mxu0 %v1247
    %2308 = vmatprep.subr.bf16.mxu0 0
    %2309 = vmatpush1.bf16.msra.mxu0 %v1250
    %2310 = vmatprep.mubr.bf16.mxu0 %v2018
    %2311 = vmatmul.mubr.bf16.gmra.mrb[0].mxu0 %v2017
    %v2312 = vpop.f32.mrb[0].mxu0
    %v2313 = vadd.f32 %v2273, %v2312
    %v2314 = vpop.f32.mrb[0].mxu0
    %v2315 = vpop.f32.mrb[0].mxu0
    %v2316 = vpop.f32.mrb[0].mxu0
    %2317 = vdwg.mxu0
    %2318 = vmatprep.subr.bf16.mxu0 0
    %2319 = vmatpush1.bf16.msra.mxu0 %v1253
    %2320 = vmatprep.subr.bf16.mxu0 0
    %2321 = vmatpush1.bf16.msra.mxu0 %v1256
    %2322 = vmatprep.subr.bf16.mxu0 0
    %2323 = vmatpush1.bf16.msra.mxu0 %v1259
    %2324 = vmatprep.subr.bf16.mxu0 0
    %2325 = vmatpush1.bf16.msra.mxu0 %v1262
    %2326 = vmatprep.subr.bf16.mxu0 0
    %2327 = vmatpush1.bf16.msra.mxu0 %v1265
    %2328 = vmatprep.subr.bf16.mxu0 0
    %2329 = vmatpush1.bf16.msra.mxu0 %v1268
    %2330 = vmatprep.subr.bf16.mxu0 0
    %2331 = vmatpush1.bf16.msra.mxu0 %v1271
    %2332 = vmatprep.subr.bf16.mxu0 0
    %2333 = vmatpush1.bf16.msra.mxu0 %v1274
    %2334 = vmatprep.subr.bf16.mxu0 0
    %2335 = vmatpush1.bf16.msra.mxu0 %v1277
    %2336 = vmatprep.subr.bf16.mxu0 0
    %2337 = vmatpush1.bf16.msra.mxu0 %v1280
    %2338 = vmatprep.subr.bf16.mxu0 0
    %2339 = vmatpush1.bf16.msra.mxu0 %v1283
    %2340 = vmatprep.subr.bf16.mxu0 0
    %2341 = vmatpush1.bf16.msra.mxu0 %v1286
    %2342 = vmatprep.subr.bf16.mxu0 0
    %2343 = vmatpush1.bf16.msra.mxu0 %v1289
    %2344 = vmatprep.subr.bf16.mxu0 0
    %2345 = vmatpush1.bf16.msra.mxu0 %v1292
    %2346 = vmatprep.subr.bf16.mxu0 0
    %2347 = vmatpush1.bf16.msra.mxu0 %v1295
    %2348 = vmatprep.subr.bf16.mxu0 0
    %2349 = vmatpush1.bf16.msra.mxu0 %v1298
    %2350 = vmatprep.mubr.bf16.mxu0 %v2020
    %2351 = vmatmul.mubr.bf16.gmra.mrb[0].mxu0 %v2019
    %v2352 = vpop.f32.mrb[0].mxu0
    %v2353 = vadd.f32 %v2313, %v2352
    %v2354 = vpop.f32.mrb[0].mxu0
    %v2355 = vpop.f32.mrb[0].mxu0
    %v2356 = vpop.f32.mrb[0].mxu0
    %2357 = vdwg.mxu0
    %2358 = vmatprep.subr.bf16.mxu0 0
    %2359 = vmatpush1.bf16.msra.mxu0 %v1301
    %2360 = vmatprep.subr.bf16.mxu0 0
    %2361 = vmatpush1.bf16.msra.mxu0 %v1304
    %2362 = vmatprep.subr.bf16.mxu0 0
    %2363 = vmatpush1.bf16.msra.mxu0 %v1307
    %2364 = vmatprep.subr.bf16.mxu0 0
    %2365 = vmatpush1.bf16.msra.mxu0 %v1310
    %2366 = vmatprep.subr.bf16.mxu0 0
    %2367 = vmatpush1.bf16.msra.mxu0 %v1313
    %2368 = vmatprep.subr.bf16.mxu0 0
    %2369 = vmatpush1.bf16.msra.mxu0 %v1316
    %2370 = vmatprep.subr.bf16.mxu0 0
    %2371 = vmatpush1.bf16.msra.mxu0 %v1319
    %2372 = vmatprep.subr.bf16.mxu0 0
    %2373 = vmatpush1.bf16.msra.mxu0 %v1322
    %2374 = vmatprep.subr.bf16.mxu0 0
    %2375 = vmatpush1.bf16.msra.mxu0 %v1325
    %2376 = vmatprep.subr.bf16.mxu0 0
    %2377 = vmatpush1.bf16.msra.mxu0 %v1328
    %2378 = vmatprep.subr.bf16.mxu0 0
    %2379 = vmatpush1.bf16.msra.mxu0 %v1331
    %2380 = vmatprep.subr.bf16.mxu0 0
    %2381 = vmatpush1.bf16.msra.mxu0 %v1334
    %2382 = vmatprep.subr.bf16.mxu0 0
    %2383 = vmatpush1.bf16.msra.mxu0 %v1337
    %2384 = vmatprep.subr.bf16.mxu0 0
    %2385 = vmatpush1.bf16.msra.mxu0 %v1340
    %2386 = vmatprep.subr.bf16.mxu0 0
    %2387 = vmatpush1.bf16.msra.mxu0 %v1343
    %2388 = vmatprep.subr.bf16.mxu0 0
    %2389 = vmatpush1.bf16.msra.mxu0 %v1346
    %2390 = vmatprep.mubr.bf16.mxu0 %v2022
    %2391 = vmatmul.mubr.bf16.gmra.mrb[0].mxu0 %v2021
    %v2392 = vpop.f32.mrb[0].mxu0
    %v2393 = vadd.f32 %v2353, %v2392
    %v2394 = vpop.f32.mrb[0].mxu0
    %v2395 = vpop.f32.mrb[0].mxu0
    %v2396 = vpop.f32.mrb[0].mxu0
    %2397 = vdwg.mxu0
    %2398 = vmatprep.subr.bf16.mxu0 0
    %2399 = vmatpush1.bf16.msra.mxu0 %v1349
    %2400 = vmatprep.subr.bf16.mxu0 0
    %2401 = vmatpush1.bf16.msra.mxu0 %v1352
    %2402 = vmatprep.subr.bf16.mxu0 0
    %2403 = vmatpush1.bf16.msra.mxu0 %v1355
    %2404 = vmatprep.subr.bf16.mxu0 0
    %2405 = vmatpush1.bf16.msra.mxu0 %v1358
    %2406 = vmatprep.subr.bf16.mxu0 0
    %2407 = vmatpush1.bf16.msra.mxu0 %v1361
    %2408 = vmatprep.subr.bf16.mxu0 0
    %2409 = vmatpush1.bf16.msra.mxu0 %v1364
    %2410 = vmatprep.subr.bf16.mxu0 0
    %2411 = vmatpush1.bf16.msra.mxu0 %v1367
    %2412 = vmatprep.subr.bf16.mxu0 0
    %2413 = vmatpush1.bf16.msra.mxu0 %v1370
    %2414 = vmatprep.subr.bf16.mxu0 0
    %2415 = vmatpush1.bf16.msra.mxu0 0
    %2416 = vmatprep.subr.bf16.mxu0 0
    %2417 = vmatpush1.bf16.msra.mxu0 0
    %2418 = vmatprep.subr.bf16.mxu0 0
    %2419 = vmatpush1.bf16.msra.mxu0 0
    %2420 = vmatprep.subr.bf16.mxu0 0
    %2421 = vmatpush1.bf16.msra.mxu0 0
    %2422 = vmatprep.subr.bf16.mxu0 0
    %2423 = vmatpush1.bf16.msra.mxu0 0
    %2424 = vmatprep.subr.bf16.mxu0 0
    %2425 = vmatpush1.bf16.msra.mxu0 0
    %2426 = vmatprep.subr.bf16.mxu0 0
    %2427 = vmatpush1.bf16.msra.mxu0 0
    %2428 = vmatprep.subr.bf16.mxu0 0
    %2429 = vmatpush1.bf16.msra.mxu0 0
    %2430 = vmatprep.mubr.bf16.mxu0 0
    %2431 = vmatmul.mubr.bf16.gmra.mrb[0].mxu0 %v2023
    %v2432 = vpop.f32.mrb[0].mxu0
    %v2433 = vadd.f32 %v2393, %v2432
    %v2434 = vpop.f32.mrb[0].mxu0
    %v2435 = vpop.f32.mrb[0].mxu0
    %v2436 = vpop.f32.mrb[0].mxu0
    %2437 = vdwg.mxu0
    %vm2438 = vcmp.gt.f32.partialorder %v2232, 0.0
    %vm2439 = vcmp.gt.f32.partialorder %v2234, 0.0
    %vm2440 = vcmp.gt.f32.partialorder %v2433, 0.0
    %v2441 = vmul.f32 %v2232, 0.2
    %v2442 = vmul.f32 %v2234, 0.2
    %v2443 = vmul.f32 %v2433, 0.2
    %v2444 = vsel %vm2438, %v2232, %v2441
    %v2445 = vsel %vm2439, %v2234, %v2442
    %v2446 = vsel %vm2440, %v2433, %v2443
    %s2447 = smul.u32 4, 48
    %s2448 = smul.u32 %s2447, 3
    %s2449 = sshll.u32 %s2448, 4
    %2450 = dma.done [#allocation4], %s2449
    %v2451 = vld [vmem:[#allocation2] sm:$0xff]
    %v2452 = vld [vmem:[#allocation2 + $0x8] sm:$0xff]
    %v2453 = vld [vmem:[#allocation2 + $0x10] sm:$0xff]
    %v2454 = vld [vmem:[#allocation2 + $0x18] sm:$0xff]
    %v2455 = vld [vmem:[#allocation2 + $0x20] sm:$0xff]
    %v2456 = vld [vmem:[#allocation2 + $0x28] sm:$0xff]
    %v2457 = vld [vmem:[#allocation2 + $0x30] sm:$0xff]
    %v2458 = vld [vmem:[#allocation2 + $0x38] sm:$0xff]
    %v2459 = vld [vmem:[#allocation2 + $0x40] sm:$0xff]
    %v2460 = vld [vmem:[#allocation2 + $0x48] sm:$0xff]
    %v2461 = vld [vmem:[#allocation2 + $0x50] sm:$0xff]
    %v2462 = vld [vmem:[#allocation2 + $0x58] sm:$0xff]
    %v2463 = vld [vmem:[#allocation2 + $0x60] sm:$0xff]
    %v2464 = vld [vmem:[#allocation2 + $0x68] sm:$0xff]
    %v2465 = vld [vmem:[#allocation2 + $0x70] sm:$0xff]
    %v2466 = vld [vmem:[#allocation2 + $0x78] sm:$0xff]
    %v2467 = vld [vmem:[#allocation2 + $0x80] sm:$0xff]
    %v2468 = vld [vmem:[#allocation2 + $0x88] sm:$0xff]
    %v2469 = vld [vmem:[#allocation2 + $0x90] sm:$0xff]
    %v2470 = vld [vmem:[#allocation2 + $0x98] sm:$0xff]
    %v2471 = vld [vmem:[#allocation2 + $0xa0] sm:$0xff]
    %v2472 = vld [vmem:[#allocation2 + $0xa8] sm:$0xff]
    %v2473 = vld [vmem:[#allocation2 + $0xb0] sm:$0xff]
    %v2474 = vld [vmem:[#allocation2 + $0xb8] sm:$0xff]
    %v2475 = vld [vmem:[#allocation2 + $0xc0] sm:$0xff]
    %v2476 = vld [vmem:[#allocation2 + $0xc8] sm:$0xff]
    %v2477 = vld [vmem:[#allocation2 + $0xd0] sm:$0xff]
    %v2478 = vld [vmem:[#allocation2 + $0xd8] sm:$0xff]
    %v2479 = vld [vmem:[#allocation2 + $0xe0] sm:$0xff]
    %v2480 = vld [vmem:[#allocation2 + $0xe8] sm:$0xff]
    %v2481 = vld [vmem:[#allocation2 + $0xf0] sm:$0xff]
    %v2482 = vld [vmem:[#allocation2 + $0xf8] sm:$0xff]
    %v2483 = vld [vmem:[#allocation2 + $0x100] sm:$0xff]
    %v2484 = vld [vmem:[#allocation2 + $0x108] sm:$0xff]
    %v2485 = vld [vmem:[#allocation2 + $0x110] sm:$0xff]
    %v2486 = vld [vmem:[#allocation2 + $0x118] sm:$0xff]
    %v2487 = vld [vmem:[#allocation2 + $0x120] sm:$0xff]
    %v2488 = vld [vmem:[#allocation2 + $0x128] sm:$0xff]
    %v2489 = vld [vmem:[#allocation2 + $0x130] sm:$0xff]
    %v2490 = vld [vmem:[#allocation2 + $0x138] sm:$0xff]
    %v2491 = vld [vmem:[#allocation2 + $0x140] sm:$0xff]
    %v2492 = vld [vmem:[#allocation2 + $0x148] sm:$0xff]
    %v2493 = vld [vmem:[#allocation2 + $0x150] sm:$0xff]
    %v2494 = vld [vmem:[#allocation2 + $0x158] sm:$0xff]
    %v2495 = vld [vmem:[#allocation2 + $0x160] sm:$0xff]
    %v2496 = vld [vmem:[#allocation2 + $0x168] sm:$0xff]
    %v2497 = vld [vmem:[#allocation2 + $0x170] sm:$0xff]
    %v2498 = vld [vmem:[#allocation2 + $0x178] sm:$0xff]
    %v2499 = vld [vmem:[#allocation2 + $0x180] sm:$0xff]
    %v2500 = vld [vmem:[#allocation2 + $0x188] sm:$0xff]
    %v2501 = vld [vmem:[#allocation2 + $0x190] sm:$0xff]
    %v2502 = vld [vmem:[#allocation2 + $0x198] sm:$0xff]
    %v2503 = vld [vmem:[#allocation2 + $0x1a0] sm:$0xff]
    %v2504 = vld [vmem:[#allocation2 + $0x1a8] sm:$0xff]
    %v2505 = vld [vmem:[#allocation2 + $0x1b0] sm:$0xff]
    %v2506 = vld [vmem:[#allocation2 + $0x1b8] sm:$0xff]
    %v2507 = vld [vmem:[#allocation2 + $0x1c0] sm:$0xff]
    %v2508 = vld [vmem:[#allocation2 + $0x1c8] sm:$0xff]
    %v2509 = vld [vmem:[#allocation2 + $0x1d0] sm:$0xff]
    %v2510 = vld [vmem:[#allocation2 + $0x1d8] sm:$0xff]
    %v2511 = vld [vmem:[#allocation2 + $0x1e0] sm:$0xff]
    %v2512 = vld [vmem:[#allocation2 + $0x1e8] sm:$0xff]
    %v2513 = vld [vmem:[#allocation2 + $0x1f0] sm:$0xff]
    %v2514 = vld [vmem:[#allocation2 + $0x1f8] sm:$0xff]
    %v2515 = vld [vmem:[#allocation2 + $0x200] sm:$0xff]
    %v2516 = vld [vmem:[#allocation2 + $0x208] sm:$0xff]
    %v2517 = vld [vmem:[#allocation2 + $0x210] sm:$0xff]
    %v2518 = vld [vmem:[#allocation2 + $0x218] sm:$0xff]
    %v2519 = vld [vmem:[#allocation2 + $0x220] sm:$0xff]
    %v2520 = vld [vmem:[#allocation2 + $0x228] sm:$0xff]
    %v2521 = vld [vmem:[#allocation2 + $0x230] sm:$0xff]
    %v2522 = vld [vmem:[#allocation2 + $0x238] sm:$0xff]
    %v2523 = vpack.c.bf16 %v1998, %v1998
    %v2524 = vpack.c.bf16 %v1999, %v1999
    %v2525 = vpack.c.bf16 %v2000, %v2000
    %2526 = vmatprep.subr.bf16.mxu0 %v2452
    %2527 = vmatpush1.bf16.msra.mxu0 %v2451
    %2528 = vmatprep.subr.bf16.mxu0 %v2455
    %2529 = vmatpush1.bf16.msra.mxu0 %v2454
    %2530 = vmatprep.subr.bf16.mxu0 %v2458
    %2531 = vmatpush1.bf16.msra.mxu0 %v2457
    %2532 = vmatprep.subr.bf16.mxu0 %v2461
    %2533 = vmatpush1.bf16.msra.mxu0 %v2460
    %2534 = vmatprep.subr.bf16.mxu0 %v2464
    %2535 = vmatpush1.bf16.msra.mxu0 %v2463
    %2536 = vmatprep.subr.bf16.mxu0 %v2467
    %2537 = vmatpush1.bf16.msra.mxu0 %v2466
    %2538 = vmatprep.subr.bf16.mxu0 %v2470
    %2539 = vmatpush1.bf16.msra.mxu0 %v2469
    %2540 = vmatprep.subr.bf16.mxu0 %v2473
    %2541 = vmatpush1.bf16.msra.mxu0 %v2472
    %2542 = vmatprep.subr.bf16.mxu0 %v2476
    %2543 = vmatpush1.bf16.msra.mxu0 %v2475
    %2544 = vmatprep.subr.bf16.mxu0 %v2479
    %2545 = vmatpush1.bf16.msra.mxu0 %v2478
    %2546 = vmatprep.subr.bf16.mxu0 %v2482
    %2547 = vmatpush1.bf16.msra.mxu0 %v2481
    %2548 = vmatprep.subr.bf16.mxu0 %v2485
    %2549 = vmatpush1.bf16.msra.mxu0 %v2484
    %2550 = vmatprep.subr.bf16.mxu0 %v2488
    %2551 = vmatpush1.bf16.msra.mxu0 %v2487
    %2552 = vmatprep.subr.bf16.mxu0 %v2491
    %2553 = vmatpush1.bf16.msra.mxu0 %v2490
    %2554 = vmatprep.subr.bf16.mxu0 %v2494
    %2555 = vmatpush1.bf16.msra.mxu0 %v2493
    %2556 = vmatprep.subr.bf16.mxu0 %v2497
    %2557 = vmatpush1.bf16.msra.mxu0 %v2496
    %2558 = vmatprep.mubr.bf16.mxu0 %v2524
    %2559 = vmatmul.mubr.bf16.gmra.mrb[0].mxu0 %v2523
    %v2560 = vpop.f32.mrb[0].mxu0
    %v2561 = vadd.f32 0.0, %v2560
    %v2562 = vpop.f32.mrb[0].mxu0
    %v2563 = vadd.f32 0.0, %v2562
    %v2564 = vpop.f32.mrb[0].mxu0
    %v2565 = vpop.f32.mrb[0].mxu0
    %2566 = vdwg.mxu0
    %2567 = vmatprep.subr.bf16.mxu0 %v2500
    %2568 = vmatpush1.bf16.msra.mxu0 %v2499
    %2569 = vmatprep.subr.bf16.mxu0 %v2503
    %2570 = vmatpush1.bf16.msra.mxu0 %v2502
    %2571 = vmatprep.subr.bf16.mxu0 %v2506
    %2572 = vmatpush1.bf16.msra.mxu0 %v2505
    %2573 = vmatprep.subr.bf16.mxu0 %v2509
    %2574 = vmatpush1.bf16.msra.mxu0 %v2508
    %2575 = vmatprep.subr.bf16.mxu0 %v2512
    %2576 = vmatpush1.bf16.msra.mxu0 %v2511
    %2577 = vmatprep.subr.bf16.mxu0 %v2515
    %2578 = vmatpush1.bf16.msra.mxu0 %v2514
    %2579 = vmatprep.subr.bf16.mxu0 %v2518
    %2580 = vmatpush1.bf16.msra.mxu0 %v2517
    %2581 = vmatprep.subr.bf16.mxu0 %v2521
    %2582 = vmatpush1.bf16.msra.mxu0 %v2520
    %2583 = vmatprep.subr.bf16.mxu0 0
    %2584 = vmatpush1.bf16.msra.mxu0 0
    %2585 = vmatprep.subr.bf16.mxu0 0
    %2586 = vmatpush1.bf16.msra.mxu0 0
    %2587 = vmatprep.subr.bf16.mxu0 0
    %2588 = vmatpush1.bf16.msra.mxu0 0
    %2589 = vmatprep.subr.bf16.mxu0 0
    %2590 = vmatpush1.bf16.msra.mxu0 0
    %2591 = vmatprep.subr.bf16.mxu0 0
    %2592 = vmatpush1.bf16.msra.mxu0 0
    %2593 = vmatprep.subr.bf16.mxu0 0
    %2594 = vmatpush1.bf16.msra.mxu0 0
    %2595 = vmatprep.subr.bf16.mxu0 0
    %2596 = vmatpush1.bf16.msra.mxu0 0
    %2597 = vmatprep.subr.bf16.mxu0 0
    %2598 = vmatpush1.bf16.msra.mxu0 0
    %2599 = vmatprep.mubr.bf16.mxu0 0
    %2600 = vmatmul.mubr.bf16.gmra.mrb[0].mxu0 %v2525
    %v2601 = vpop.f32.mrb[0].mxu0
    %v2602 = vadd.f32 %v2561, %v2601
    %v2603 = vpop.f32.mrb[0].mxu0
    %v2604 = vadd.f32 %v2563, %v2603
    %v2605 = vpop.f32.mrb[0].mxu0
    %v2606 = vpop.f32.mrb[0].mxu0
    %2607 = vdwg.mxu0
    %2608 = vmatprep.subr.bf16.mxu0 0
    %2609 = vmatpush1.bf16.msra.mxu0 %v2453
    %2610 = vmatprep.subr.bf16.mxu0 0
    %2611 = vmatpush1.bf16.msra.mxu0 %v2456
    %2612 = vmatprep.subr.bf16.mxu0 0
    %2613 = vmatpush1.bf16.msra.mxu0 %v2459
    %2614 = vmatprep.subr.bf16.mxu0 0
    %2615 = vmatpush1.bf16.msra.mxu0 %v2462
    %2616 = vmatprep.subr.bf16.mxu0 0
    %2617 = vmatpush1.bf16.msra.mxu0 %v2465
    %2618 = vmatprep.subr.bf16.mxu0 0
    %2619 = vmatpush1.bf16.msra.mxu0 %v2468
    %2620 = vmatprep.subr.bf16.mxu0 0
    %2621 = vmatpush1.bf16.msra.mxu0 %v2471
    %2622 = vmatprep.subr.bf16.mxu0 0
    %2623 = vmatpush1.bf16.msra.mxu0 %v2474
    %2624 = vmatprep.subr.bf16.mxu0 0
    %2625 = vmatpush1.bf16.msra.mxu0 %v2477
    %2626 = vmatprep.subr.bf16.mxu0 0
    %2627 = vmatpush1.bf16.msra.mxu0 %v2480
    %2628 = vmatprep.subr.bf16.mxu0 0
    %2629 = vmatpush1.bf16.msra.mxu0 %v2483
    %2630 = vmatprep.subr.bf16.mxu0 0
    %2631 = vmatpush1.bf16.msra.mxu0 %v2486
    %2632 = vmatprep.subr.bf16.mxu0 0
    %2633 = vmatpush1.bf16.msra.mxu0 %v2489
    %2634 = vmatprep.subr.bf16.mxu0 0
    %2635 = vmatpush1.bf16.msra.mxu0 %v2492
    %2636 = vmatprep.subr.bf16.mxu0 0
    %2637 = vmatpush1.bf16.msra.mxu0 %v2495
    %2638 = vmatprep.subr.bf16.mxu0 0
    %2639 = vmatpush1.bf16.msra.mxu0 %v2498
    %2640 = vmatprep.mubr.bf16.mxu0 %v2524
    %2641 = vmatmul.mubr.bf16.gmra.mrb[0].mxu0 %v2523
    %v2642 = vpop.f32.mrb[0].mxu0
    %v2643 = vadd.f32 0.0, %v2642
    %v2644 = vpop.f32.mrb[0].mxu0
    %v2645 = vpop.f32.mrb[0].mxu0
    %v2646 = vpop.f32.mrb[0].mxu0
    %2647 = vdwg.mxu0
    %2648 = vmatprep.subr.bf16.mxu0 0
    %2649 = vmatpush1.bf16.msra.mxu0 %v2501
    %2650 = vmatprep.subr.bf16.mxu0 0
    %2651 = vmatpush1.bf16.msra.mxu0 %v2504
    %2652 = vmatprep.subr.bf16.mxu0 0
    %2653 = vmatpush1.bf16.msra.mxu0 %v2507
    %2654 = vmatprep.subr.bf16.mxu0 0
    %2655 = vmatpush1.bf16.msra.mxu0 %v2510
    %2656 = vmatprep.subr.bf16.mxu0 0
    %2657 = vmatpush1.bf16.msra.mxu0 %v2513
    %2658 = vmatprep.subr.bf16.mxu0 0
    %2659 = vmatpush1.bf16.msra.mxu0 %v2516
    %2660 = vmatprep.subr.bf16.mxu0 0
    %2661 = vmatpush1.bf16.msra.mxu0 %v2519
    %2662 = vmatprep.subr.bf16.mxu0 0
    %2663 = vmatpush1.bf16.msra.mxu0 %v2522
    %2664 = vmatprep.subr.bf16.mxu0 0
    %2665 = vmatpush1.bf16.msra.mxu0 0
    %2666 = vmatprep.subr.bf16.mxu0 0
    %2667 = vmatpush1.bf16.msra.mxu0 0
    %2668 = vmatprep.subr.bf16.mxu0 0
    %2669 = vmatpush1.bf16.msra.mxu0 0
    %2670 = vmatprep.subr.bf16.mxu0 0
    %2671 = vmatpush1.bf16.msra.mxu0 0
    %2672 = vmatprep.subr.bf16.mxu0 0
    %2673 = vmatpush1.bf16.msra.mxu0 0
    %2674 = vmatprep.subr.bf16.mxu0 0
    %2675 = vmatpush1.bf16.msra.mxu0 0
    %2676 = vmatprep.subr.bf16.mxu0 0
    %2677 = vmatpush1.bf16.msra.mxu0 0
    %2678 = vmatprep.subr.bf16.mxu0 0
    %2679 = vmatpush1.bf16.msra.mxu0 0
    %2680 = vmatprep.mubr.bf16.mxu0 0
    %2681 = vmatmul.mubr.bf16.gmra.mrb[0].mxu0 %v2525
    %v2682 = vpop.f32.mrb[0].mxu0
    %v2683 = vadd.f32 %v2643, %v2682
    %v2684 = vpop.f32.mrb[0].mxu0
    %v2685 = vpop.f32.mrb[0].mxu0
    %v2686 = vpop.f32.mrb[0].mxu0
    %2687 = vdwg.mxu0
    %vm2688 = vcmp.gt.f32.partialorder %v2602, 0.0
    %vm2689 = vcmp.gt.f32.partialorder %v2604, 0.0
    %vm2690 = vcmp.gt.f32.partialorder %v2683, 0.0
    %v2691 = vmul.f32 %v2602, 0.2
    %v2692 = vmul.f32 %v2604, 0.2
    %v2693 = vmul.f32 %v2683, 0.2
    %v2694 = vsel %vm2688, %v2602, %v2691
    %v2695 = vsel %vm2689, %v2604, %v2692
    %v2696 = vsel %vm2690, %v2683, %v2693
    %v2697 = vpack.c.bf16 %v2444, %v2444
    %v2698 = vpack.c.bf16 %v2445, %v2445
    %v2699 = vpack.c.bf16 %v2446, %v2446
    %2700 = vmatprep.subr.bf16.mxu0 %v2452
    %2701 = vmatpush1.bf16.msra.mxu0 %v2451
    %2702 = vmatprep.subr.bf16.mxu0 %v2455
    %2703 = vmatpush1.bf16.msra.mxu0 %v2454
    %2704 = vmatprep.subr.bf16.mxu0 %v2458
    %2705 = vmatpush1.bf16.msra.mxu0 %v2457
    %2706 = vmatprep.subr.bf16.mxu0 %v2461
    %2707 = vmatpush1.bf16.msra.mxu0 %v2460
    %2708 = vmatprep.subr.bf16.mxu0 %v2464
    %2709 = vmatpush1.bf16.msra.mxu0 %v2463
    %2710 = vmatprep.subr.bf16.mxu0 %v2467
    %2711 = vmatpush1.bf16.msra.mxu0 %v2466
    %2712 = vmatprep.subr.bf16.mxu0 %v2470
    %2713 = vmatpush1.bf16.msra.mxu0 %v2469
    %2714 = vmatprep.subr.bf16.mxu0 %v2473
    %2715 = vmatpush1.bf16.msra.mxu0 %v2472
    %2716 = vmatprep.subr.bf16.mxu0 %v2476
    %2717 = vmatpush1.bf16.msra.mxu0 %v2475
    %2718 = vmatprep.subr.bf16.mxu0 %v2479
    %2719 = vmatpush1.bf16.msra.mxu0 %v2478
    %2720 = vmatprep.subr.bf16.mxu0 %v2482
    %2721 = vmatpush1.bf16.msra.mxu0 %v2481
    %2722 = vmatprep.subr.bf16.mxu0 %v2485
    %2723 = vmatpush1.bf16.msra.mxu0 %v2484
    %2724 = vmatprep.subr.bf16.mxu0 %v2488
    %2725 = vmatpush1.bf16.msra.mxu0 %v2487
    %2726 = vmatprep.subr.bf16.mxu0 %v2491
    %2727 = vmatpush1.bf16.msra.mxu0 %v2490
    %2728 = vmatprep.subr.bf16.mxu0 %v2494
    %2729 = vmatpush1.bf16.msra.mxu0 %v2493
    %2730 = vmatprep.subr.bf16.mxu0 %v2497
    %2731 = vmatpush1.bf16.msra.mxu0 %v2496
    %2732 = vmatprep.mubr.bf16.mxu0 %v2698
    %2733 = vmatmul.mubr.bf16.gmra.mrb[0].mxu0 %v2697
    %v2734 = vpop.f32.mrb[0].mxu0
    %v2735 = vadd.f32 0.0, %v2734
    %v2736 = vpop.f32.mrb[0].mxu0
    %v2737 = vadd.f32 0.0, %v2736
    %v2738 = vpop.f32.mrb[0].mxu0
    %v2739 = vpop.f32.mrb[0].mxu0
    %2740 = vdwg.mxu0
    %2741 = vmatprep.subr.bf16.mxu0 %v2500
    %2742 = vmatpush1.bf16.msra.mxu0 %v2499
    %2743 = vmatprep.subr.bf16.mxu0 %v2503
    %2744 = vmatpush1.bf16.msra.mxu0 %v2502
    %2745 = vmatprep.subr.bf16.mxu0 %v2506
    %2746 = vmatpush1.bf16.msra.mxu0 %v2505
    %2747 = vmatprep.subr.bf16.mxu0 %v2509
    %2748 = vmatpush1.bf16.msra.mxu0 %v2508
    %2749 = vmatprep.subr.bf16.mxu0 %v2512
    %2750 = vmatpush1.bf16.msra.mxu0 %v2511
    %2751 = vmatprep.subr.bf16.mxu0 %v2515
    %2752 = vmatpush1.bf16.msra.mxu0 %v2514
    %2753 = vmatprep.subr.bf16.mxu0 %v2518
    %2754 = vmatpush1.bf16.msra.mxu0 %v2517
    %2755 = vmatprep.subr.bf16.mxu0 %v2521
    %2756 = vmatpush1.bf16.msra.mxu0 %v2520
    %2757 = vmatprep.subr.bf16.mxu0 0
    %2758 = vmatpush1.bf16.msra.mxu0 0
    %2759 = vmatprep.subr.bf16.mxu0 0
    %2760 = vmatpush1.bf16.msra.mxu0 0
    %2761 = vmatprep.subr.bf16.mxu0 0
    %2762 = vmatpush1.bf16.msra.mxu0 0
    %2763 = vmatprep.subr.bf16.mxu0 0
    %2764 = vmatpush1.bf16.msra.mxu0 0
    %2765 = vmatprep.subr.bf16.mxu0 0
    %2766 = vmatpush1.bf16.msra.mxu0 0
    %2767 = vmatprep.subr.bf16.mxu0 0
    %2768 = vmatpush1.bf16.msra.mxu0 0
    %2769 = vmatprep.subr.bf16.mxu0 0
    %2770 = vmatpush1.bf16.msra.mxu0 0
    %2771 = vmatprep.subr.bf16.mxu0 0
    %2772 = vmatpush1.bf16.msra.mxu0 0
    %2773 = vmatprep.mubr.bf16.mxu0 0
    %2774 = vmatmul.mubr.bf16.gmra.mrb[0].mxu0 %v2699
    %v2775 = vpop.f32.mrb[0].mxu0
    %v2776 = vadd.f32 %v2735, %v2775
    %v2777 = vpop.f32.mrb[0].mxu0
    %v2778 = vadd.f32 %v2737, %v2777
    %v2779 = vpop.f32.mrb[0].mxu0
    %v2780 = vpop.f32.mrb[0].mxu0
    %2781 = vdwg.mxu0
    %2782 = vmatprep.subr.bf16.mxu0 0
    %2783 = vmatpush1.bf16.msra.mxu0 %v2453
    %2784 = vmatprep.subr.bf16.mxu0 0
    %2785 = vmatpush1.bf16.msra.mxu0 %v2456
    %2786 = vmatprep.subr.bf16.mxu0 0
    %2787 = vmatpush1.bf16.msra.mxu0 %v2459
    %2788 = vmatprep.subr.bf16.mxu0 0
    %2789 = vmatpush1.bf16.msra.mxu0 %v2462
    %2790 = vmatprep.subr.bf16.mxu0 0
    %2791 = vmatpush1.bf16.msra.mxu0 %v2465
    %2792 = vmatprep.subr.bf16.mxu0 0
    %2793 = vmatpush1.bf16.msra.mxu0 %v2468
    %2794 = vmatprep.subr.bf16.mxu0 0
    %2795 = vmatpush1.bf16.msra.mxu0 %v2471
    %2796 = vmatprep.subr.bf16.mxu0 0
    %2797 = vmatpush1.bf16.msra.mxu0 %v2474
    %2798 = vmatprep.subr.bf16.mxu0 0
    %2799 = vmatpush1.bf16.msra.mxu0 %v2477
    %2800 = vmatprep.subr.bf16.mxu0 0
    %2801 = vmatpush1.bf16.msra.mxu0 %v2480
    %2802 = vmatprep.subr.bf16.mxu0 0
    %2803 = vmatpush1.bf16.msra.mxu0 %v2483
    %2804 = vmatprep.subr.bf16.mxu0 0
    %2805 = vmatpush1.bf16.msra.mxu0 %v2486
    %2806 = vmatprep.subr.bf16.mxu0 0
    %2807 = vmatpush1.bf16.msra.mxu0 %v2489
    %2808 = vmatprep.subr.bf16.mxu0 0
    %2809 = vmatpush1.bf16.msra.mxu0 %v2492
    %2810 = vmatprep.subr.bf16.mxu0 0
    %2811 = vmatpush1.bf16.msra.mxu0 %v2495
    %2812 = vmatprep.subr.bf16.mxu0 0
    %2813 = vmatpush1.bf16.msra.mxu0 %v2498
    %2814 = vmatprep.mubr.bf16.mxu0 %v2698
    %2815 = vmatmul.mubr.bf16.gmra.mrb[0].mxu0 %v2697
    %v2816 = vpop.f32.mrb[0].mxu0
    %v2817 = vadd.f32 0.0, %v2816
    %v2818 = vpop.f32.mrb[0].mxu0
    %v2819 = vpop.f32.mrb[0].mxu0
    %v2820 = vpop.f32.mrb[0].mxu0
    %2821 = vdwg.mxu0
    %2822 = vmatprep.subr.bf16.mxu0 0
    %2823 = vmatpush1.bf16.msra.mxu0 %v2501
    %2824 = vmatprep.subr.bf16.mxu0 0
    %2825 = vmatpush1.bf16.msra.mxu0 %v2504
    %2826 = vmatprep.subr.bf16.mxu0 0
    %2827 = vmatpush1.bf16.msra.mxu0 %v2507
    %2828 = vmatprep.subr.bf16.mxu0 0
    %2829 = vmatpush1.bf16.msra.mxu0 %v2510
    %2830 = vmatprep.subr.bf16.mxu0 0
    %2831 = vmatpush1.bf16.msra.mxu0 %v2513
    %2832 = vmatprep.subr.bf16.mxu0 0
    %2833 = vmatpush1.bf16.msra.mxu0 %v2516
    %2834 = vmatprep.subr.bf16.mxu0 0
    %2835 = vmatpush1.bf16.msra.mxu0 %v2519
    %2836 = vmatprep.subr.bf16.mxu0 0
    %2837 = vmatpush1.bf16.msra.mxu0 %v2522
    %2838 = vmatprep.subr.bf16.mxu0 0
    %2839 = vmatpush1.bf16.msra.mxu0 0
    %2840 = vmatprep.subr.bf16.mxu0 0
    %2841 = vmatpush1.bf16.msra.mxu0 0
    %2842 = vmatprep.subr.bf16.mxu0 0
    %2843 = vmatpush1.bf16.msra.mxu0 0
    %2844 = vmatprep.subr.bf16.mxu0 0
    %2845 = vmatpush1.bf16.msra.mxu0 0
    %2846 = vmatprep.subr.bf16.mxu0 0
    %2847 = vmatpush1.bf16.msra.mxu0 0
    %2848 = vmatprep.subr.bf16.mxu0 0
    %2849 = vmatpush1.bf16.msra.mxu0 0
    %2850 = vmatprep.subr.bf16.mxu0 0
    %2851 = vmatpush1.bf16.msra.mxu0 0
    %2852 = vmatprep.subr.bf16.mxu0 0
    %2853 = vmatpush1.bf16.msra.mxu0 0
    %2854 = vmatprep.mubr.bf16.mxu0 0
    %2855 = vmatmul.mubr.bf16.gmra.mrb[0].mxu0 %v2699
    %v2856 = vpop.f32.mrb[0].mxu0
    %v2857 = vadd.f32 %v2817, %v2856
    %v2858 = vpop.f32.mrb[0].mxu0
    %v2859 = vpop.f32.mrb[0].mxu0
    %v2860 = vpop.f32.mrb[0].mxu0
    %2861 = vdwg.mxu0
    %vm2862 = vcmp.gt.f32.partialorder %v2776, 0.0
    %vm2863 = vcmp.gt.f32.partialorder %v2778, 0.0
    %vm2864 = vcmp.gt.f32.partialorder %v2857, 0.0
    %v2865 = vmul.f32 %v2776, 0.2
    %v2866 = vmul.f32 %v2778, 0.2
    %v2867 = vmul.f32 %v2857, 0.2
    %v2868 = vsel %vm2862, %v2776, %v2865
    %v2869 = vsel %vm2863, %v2778, %v2866
    %v2870 = vsel %vm2864, %v2857, %v2867
    %s2871 = smul.u32 %s2447, 2
    %s2872 = sshll.u32 %s2871, 4
    %2873 = dma.done %s80, %s2872
    %v2874 = vld [vmem:[#allocation3] sm:$0xff]
    %v2875 = vld [vmem:[#allocation3 + $0x8] sm:$0xff]
    %v2876 = vld [vmem:[#allocation3 + $0x10] sm:$0xff]
    %v2877 = vld [vmem:[#allocation3 + $0x18] sm:$0xff]
    %v2878 = vld [vmem:[#allocation3 + $0x20] sm:$0xff]
    %v2879 = vld [vmem:[#allocation3 + $0x28] sm:$0xff]
    %v2880 = vld [vmem:[#allocation3 + $0x30] sm:$0xff]
    %v2881 = vld [vmem:[#allocation3 + $0x38] sm:$0xff]
    %v2882 = vld [vmem:[#allocation3 + $0x40] sm:$0xff]
    %v2883 = vld [vmem:[#allocation3 + $0x48] sm:$0xff]
    %v2884 = vld [vmem:[#allocation3 + $0x50] sm:$0xff]
    %v2885 = vld [vmem:[#allocation3 + $0x58] sm:$0xff]
    %v2886 = vld [vmem:[#allocation3 + $0x60] sm:$0xff]
    %v2887 = vld [vmem:[#allocation3 + $0x68] sm:$0xff]
    %v2888 = vld [vmem:[#allocation3 + $0x70] sm:$0xff]
    %v2889 = vld [vmem:[#allocation3 + $0x78] sm:$0xff]
    %v2890 = vld [vmem:[#allocation3 + $0x80] sm:$0xff]
    %v2891 = vld [vmem:[#allocation3 + $0x88] sm:$0xff]
    %v2892 = vld [vmem:[#allocation3 + $0x90] sm:$0xff]
    %v2893 = vld [vmem:[#allocation3 + $0x98] sm:$0xff]
    %v2894 = vld [vmem:[#allocation3 + $0xa0] sm:$0xff]
    %v2895 = vld [vmem:[#allocation3 + $0xa8] sm:$0xff]
    %v2896 = vld [vmem:[#allocation3 + $0xb0] sm:$0xff]
    %v2897 = vld [vmem:[#allocation3 + $0xb8] sm:$0xff]
    %v2898 = vld [vmem:[#allocation3 + $0xc0] sm:$0xff]
    %v2899 = vld [vmem:[#allocation3 + $0xc8] sm:$0xff]
    %v2900 = vld [vmem:[#allocation3 + $0xd0] sm:$0xff]
    %v2901 = vld [vmem:[#allocation3 + $0xd8] sm:$0xff]
    %v2902 = vld [vmem:[#allocation3 + $0xe0] sm:$0xff]
    %v2903 = vld [vmem:[#allocation3 + $0xe8] sm:$0xff]
    %v2904 = vld [vmem:[#allocation3 + $0xf0] sm:$0xff]
    %v2905 = vld [vmem:[#allocation3 + $0xf8] sm:$0xff]
    %v2906 = vld [vmem:[#allocation3 + $0x100] sm:$0xff]
    %v2907 = vld [vmem:[#allocation3 + $0x108] sm:$0xff]
    %v2908 = vld [vmem:[#allocation3 + $0x110] sm:$0xff]
    %v2909 = vld [vmem:[#allocation3 + $0x118] sm:$0xff]
    %v2910 = vld [vmem:[#allocation3 + $0x120] sm:$0xff]
    %v2911 = vld [vmem:[#allocation3 + $0x128] sm:$0xff]
    %v2912 = vld [vmem:[#allocation3 + $0x130] sm:$0xff]
    %v2913 = vld [vmem:[#allocation3 + $0x138] sm:$0xff]
    %v2914 = vld [vmem:[#allocation3 + $0x140] sm:$0xff]
    %v2915 = vld [vmem:[#allocation3 + $0x148] sm:$0xff]
    %v2916 = vld [vmem:[#allocation3 + $0x150] sm:$0xff]
    %v2917 = vld [vmem:[#allocation3 + $0x158] sm:$0xff]
    %v2918 = vld [vmem:[#allocation3 + $0x160] sm:$0xff]
    %v2919 = vld [vmem:[#allocation3 + $0x168] sm:$0xff]
    %v2920 = vld [vmem:[#allocation3 + $0x170] sm:$0xff]
    %v2921 = vld [vmem:[#allocation3 + $0x178] sm:$0xff]
    %v2922 = vpack.c.bf16 %v2694, %v2694
    %v2923 = vpack.c.bf16 %v2695, %v2695
    %v2924 = vpack.c.bf16 %v2696, %v2696
    %2925 = vmatprep.subr.bf16.mxu0 %v2875
    %2926 = vmatpush1.bf16.msra.mxu0 %v2874
    %2927 = vmatprep.subr.bf16.mxu0 %v2877
    %2928 = vmatpush1.bf16.msra.mxu0 %v2876
    %2929 = vmatprep.subr.bf16.mxu0 %v2879
    %2930 = vmatpush1.bf16.msra.mxu0 %v2878
    %2931 = vmatprep.subr.bf16.mxu0 %v2881
    %2932 = vmatpush1.bf16.msra.mxu0 %v2880
    %2933 = vmatprep.subr.bf16.mxu0 %v2883
    %2934 = vmatpush1.bf16.msra.mxu0 %v2882
    %2935 = vmatprep.subr.bf16.mxu0 %v2885
    %2936 = vmatpush1.bf16.msra.mxu0 %v2884
    %2937 = vmatprep.subr.bf16.mxu0 %v2887
    %2938 = vmatpush1.bf16.msra.mxu0 %v2886
    %2939 = vmatprep.subr.bf16.mxu0 %v2889
    %2940 = vmatpush1.bf16.msra.mxu0 %v2888
    %2941 = vmatprep.subr.bf16.mxu0 %v2891
    %2942 = vmatpush1.bf16.msra.mxu0 %v2890
    %2943 = vmatprep.subr.bf16.mxu0 %v2893
    %2944 = vmatpush1.bf16.msra.mxu0 %v2892
    %2945 = vmatprep.subr.bf16.mxu0 %v2895
    %2946 = vmatpush1.bf16.msra.mxu0 %v2894
    %2947 = vmatprep.subr.bf16.mxu0 %v2897
    %2948 = vmatpush1.bf16.msra.mxu0 %v2896
    %2949 = vmatprep.subr.bf16.mxu0 %v2899
    %2950 = vmatpush1.bf16.msra.mxu0 %v2898
    %2951 = vmatprep.subr.bf16.mxu0 %v2901
    %2952 = vmatpush1.bf16.msra.mxu0 %v2900
    %2953 = vmatprep.subr.bf16.mxu0 %v2903
    %2954 = vmatpush1.bf16.msra.mxu0 %v2902
    %2955 = vmatprep.subr.bf16.mxu0 %v2905
    %2956 = vmatpush1.bf16.msra.mxu0 %v2904
    %2957 = vmatprep.mubr.bf16.mxu0 %v2923
    %2958 = vmatmul.mubr.bf16.gmra.mrb[0].mxu0 %v2922
    %v2959 = vpop.f32.mrb[0].mxu0
    %v2960 = vadd.f32 0.0, %v2959
    %v2961 = vpop.f32.mrb[0].mxu0
    %v2962 = vadd.f32 0.0, %v2961
    %v2963 = vpop.f32.mrb[0].mxu0
    %v2964 = vpop.f32.mrb[0].mxu0
    %2965 = vdwg.mxu0
    %2966 = vmatprep.subr.bf16.mxu0 %v2907
    %2967 = vmatpush1.bf16.msra.mxu0 %v2906
    %2968 = vmatprep.subr.bf16.mxu0 %v2909
    %2969 = vmatpush1.bf16.msra.mxu0 %v2908
    %2970 = vmatprep.subr.bf16.mxu0 %v2911
    %2971 = vmatpush1.bf16.msra.mxu0 %v2910
    %2972 = vmatprep.subr.bf16.mxu0 %v2913
    %2973 = vmatpush1.bf16.msra.mxu0 %v2912
    %2974 = vmatprep.subr.bf16.mxu0 %v2915
    %2975 = vmatpush1.bf16.msra.mxu0 %v2914
    %2976 = vmatprep.subr.bf16.mxu0 %v2917
    %2977 = vmatpush1.bf16.msra.mxu0 %v2916
    %2978 = vmatprep.subr.bf16.mxu0 %v2919
    %2979 = vmatpush1.bf16.msra.mxu0 %v2918
    %2980 = vmatprep.subr.bf16.mxu0 %v2921
    %2981 = vmatpush1.bf16.msra.mxu0 %v2920
    %2982 = vmatprep.subr.bf16.mxu0 0
    %2983 = vmatpush1.bf16.msra.mxu0 0
    %2984 = vmatprep.subr.bf16.mxu0 0
    %2985 = vmatpush1.bf16.msra.mxu0 0
    %2986 = vmatprep.subr.bf16.mxu0 0
    %2987 = vmatpush1.bf16.msra.mxu0 0
    %2988 = vmatprep.subr.bf16.mxu0 0
    %2989 = vmatpush1.bf16.msra.mxu0 0
    %2990 = vmatprep.subr.bf16.mxu0 0
    %2991 = vmatpush1.bf16.msra.mxu0 0
    %2992 = vmatprep.subr.bf16.mxu0 0
    %2993 = vmatpush1.bf16.msra.mxu0 0
    %2994 = vmatprep.subr.bf16.mxu0 0
    %2995 = vmatpush1.bf16.msra.mxu0 0
    %2996 = vmatprep.subr.bf16.mxu0 0
    %2997 = vmatpush1.bf16.msra.mxu0 0
    %2998 = vmatprep.mubr.bf16.mxu0 0
    %2999 = vmatmul.mubr.bf16.gmra.mrb[0].mxu0 %v2924
    %v3000 = vpop.f32.mrb[0].mxu0
    %v3001 = vadd.f32 %v2960, %v3000
    %v3002 = vpop.f32.mrb[0].mxu0
    %v3003 = vadd.f32 %v2962, %v3002
    %v3004 = vpop.f32.mrb[0].mxu0
    %v3005 = vpop.f32.mrb[0].mxu0
    %3006 = vdwg.mxu0
    %vm3007 = vcmp.gt.f32.partialorder %v3001, 0.0
    %vm3008 = vcmp.gt.f32.partialorder %v3003, 0.0
    %v3009 = vmul.f32 %v3001, 0.2
    %v3010 = vmul.f32 %v3003, 0.2
    %v3011 = vsel %vm3007, %v3001, %v3009
    %v3012 = vsel %vm3008, %v3003, %v3010
    %v3013 = vpack.c.bf16 %v2868, %v2868
    %v3014 = vpack.c.bf16 %v2869, %v2869
    %v3015 = vpack.c.bf16 %v2870, %v2870
    %3016 = vmatprep.subr.bf16.mxu0 %v2875
    %3017 = vmatpush1.bf16.msra.mxu0 %v2874
    %3018 = vmatprep.subr.bf16.mxu0 %v2877
    %3019 = vmatpush1.bf16.msra.mxu0 %v2876
    %3020 = vmatprep.subr.bf16.mxu0 %v2879
    %3021 = vmatpush1.bf16.msra.mxu0 %v2878
    %3022 = vmatprep.subr.bf16.mxu0 %v2881
    %3023 = vmatpush1.bf16.msra.mxu0 %v2880
    %3024 = vmatprep.subr.bf16.mxu0 %v2883
    %3025 = vmatpush1.bf16.msra.mxu0 %v2882
    %3026 = vmatprep.subr.bf16.mxu0 %v2885
    %3027 = vmatpush1.bf16.msra.mxu0 %v2884
    %3028 = vmatprep.subr.bf16.mxu0 %v2887
    %3029 = vmatpush1.bf16.msra.mxu0 %v2886
    %3030 = vmatprep.subr.bf16.mxu0 %v2889
    %3031 = vmatpush1.bf16.msra.mxu0 %v2888
    %3032 = vmatprep.subr.bf16.mxu0 %v2891
    %3033 = vmatpush1.bf16.msra.mxu0 %v2890
    %3034 = vmatprep.subr.bf16.mxu0 %v2893
    %3035 = vmatpush1.bf16.msra.mxu0 %v2892
    %3036 = vmatprep.subr.bf16.mxu0 %v2895
    %3037 = vmatpush1.bf16.msra.mxu0 %v2894
    %3038 = vmatprep.subr.bf16.mxu0 %v2897
    %3039 = vmatpush1.bf16.msra.mxu0 %v2896
    %3040 = vmatprep.subr.bf16.mxu0 %v2899
    %3041 = vmatpush1.bf16.msra.mxu0 %v2898
    %3042 = vmatprep.subr.bf16.mxu0 %v2901
    %3043 = vmatpush1.bf16.msra.mxu0 %v2900
    %3044 = vmatprep.subr.bf16.mxu0 %v2903
    %3045 = vmatpush1.bf16.msra.mxu0 %v2902
    %3046 = vmatprep.subr.bf16.mxu0 %v2905
    %3047 = vmatpush1.bf16.msra.mxu0 %v2904
    %3048 = vmatprep.mubr.bf16.mxu0 %v3014
    %3049 = vmatmul.mubr.bf16.gmra.mrb[0].mxu0 %v3013
    %v3050 = vpop.f32.mrb[0].mxu0
    %v3051 = vadd.f32 0.0, %v3050
    %v3052 = vpop.f32.mrb[0].mxu0
    %v3053 = vadd.f32 0.0, %v3052
    %v3054 = vpop.f32.mrb[0].mxu0
    %v3055 = vpop.f32.mrb[0].mxu0
    %3056 = vdwg.mxu0
    %3057 = vmatprep.subr.bf16.mxu0 %v2907
    %3058 = vmatpush1.bf16.msra.mxu0 %v2906
    %3059 = vmatprep.subr.bf16.mxu0 %v2909
    %3060 = vmatpush1.bf16.msra.mxu0 %v2908
    %3061 = vmatprep.subr.bf16.mxu0 %v2911
    %3062 = vmatpush1.bf16.msra.mxu0 %v2910
    %3063 = vmatprep.subr.bf16.mxu0 %v2913
    %3064 = vmatpush1.bf16.msra.mxu0 %v2912
    %3065 = vmatprep.subr.bf16.mxu0 %v2915
    %3066 = vmatpush1.bf16.msra.mxu0 %v2914
    %3067 = vmatprep.subr.bf16.mxu0 %v2917
    %3068 = vmatpush1.bf16.msra.mxu0 %v2916
    %3069 = vmatprep.subr.bf16.mxu0 %v2919
    %3070 = vmatpush1.bf16.msra.mxu0 %v2918
    %3071 = vmatprep.subr.bf16.mxu0 %v2921
    %3072 = vmatpush1.bf16.msra.mxu0 %v2920
    %3073 = vmatprep.subr.bf16.mxu0 0
    %3074 = vmatpush1.bf16.msra.mxu0 0
    %3075 = vmatprep.subr.bf16.mxu0 0
    %3076 = vmatpush1.bf16.msra.mxu0 0
    %3077 = vmatprep.subr.bf16.mxu0 0
    %3078 = vmatpush1.bf16.msra.mxu0 0
    %3079 = vmatprep.subr.bf16.mxu0 0
    %3080 = vmatpush1.bf16.msra.mxu0 0
    %3081 = vmatprep.subr.bf16.mxu0 0
    %3082 = vmatpush1.bf16.msra.mxu0 0
    %3083 = vmatprep.subr.bf16.mxu0 0
    %3084 = vmatpush1.bf16.msra.mxu0 0
    %3085 = vmatprep.subr.bf16.mxu0 0
    %3086 = vmatpush1.bf16.msra.mxu0 0
    %3087 = vmatprep.subr.bf16.mxu0 0
    %3088 = vmatpush1.bf16.msra.mxu0 0
    %3089 = vmatprep.mubr.bf16.mxu0 0
    %3090 = vmatmul.mubr.bf16.gmra.mrb[0].mxu0 %v3015
    %v3091 = vpop.f32.mrb[0].mxu0
    %v3092 = vadd.f32 %v3051, %v3091
    %v3093 = vpop.f32.mrb[0].mxu0
    %v3094 = vadd.f32 %v3053, %v3093
    %v3095 = vpop.f32.mrb[0].mxu0
    %v3096 = vpop.f32.mrb[0].mxu0
    %3097 = vdwg.mxu0
    %vm3098 = vcmp.gt.f32.partialorder %v3092, 0.0
    %vm3099 = vcmp.gt.f32.partialorder %v3094, 0.0
    %v3100 = vmul.f32 %v3092, 0.2
    %v3101 = vmul.f32 %v3094, 0.2
    %v3102 = vsel %vm3098, %v3092, %v3100
    %v3103 = vsel %vm3099, %v3094, %v3101
    %v3104 = vrot.slane %v3011, 4
    %v3105 = vadd.f32 %v3011, %v3104
    %v3106 = vrot.slane %v3105, 2
    %v3107 = vadd.f32 %v3105, %v3106
    %v3108 = vrot.slane %v3107, 1
    %v3109 = vadd.f32 %v3107, %v3108
    %v3110 = vrot.slane %v3012, 4
    %v3111 = vadd.f32 %v3012, %v3110
    %v3112 = vrot.slane %v3111, 2
    %v3113 = vadd.f32 %v3111, %v3112
    %v3114 = vrot.slane %v3113, 1
    %v3115 = vadd.f32 %v3113, %v3114
    %v3116 = vrot.slane %v3102, 4
    %v3117 = vadd.f32 %v3102, %v3116
    %v3118 = vrot.slane %v3117, 2
    %v3119 = vadd.f32 %v3117, %v3118
    %v3120 = vrot.slane %v3119, 1
    %v3121 = vadd.f32 %v3119, %v3120
    %v3122 = vrot.slane %v3103, 4
    %v3123 = vadd.f32 %v3103, %v3122
    %v3124 = vrot.slane %v3123, 2
    %v3125 = vadd.f32 %v3123, %v3124
    %v3126 = vrot.slane %v3125, 1
    %v3127 = vadd.f32 %v3125, %v3126
    %v3128 = vsub.f32 %v3109, %v3121
    %v3129 = vsub.f32 %v3115, %v3127
    %v3130 = vmul.f32 %v3128, 0.125
    %v3131 = vmul.f32 %v3129, 0.125
    %v3132 = vld [vmem:[%s5] sm:$0x3]
    %v3134 = vlaneseq
    %v3135 = vshrl.u32 %v3134, 7
    %v3136 = vsub.s32 0, %v3135
    %v3137 = vrot.slane %v3132, %v3136
    %v3138 = vlaneseq
    %v3139 = vshrl.u32 %v3138, 7
    %v3140 = vsub.s32 1, %v3139
    %v3141 = vrot.slane %v3132, %v3140
    %v3144 = vmul.f32 %v3130, %v3137
    %v3145 = vmul.f32 %v3131, %v3141
    %vm3146 = vcmask 1040384
    %v3147 = vsel %vm3146, %v3144, 0.0
    %v3148 = vsel %vm3146, %v3145, 0.0
    %v3149 = vadd.f32 %v3147, %v3148
    %3150 = vadd.xlane.f32.xlu0 %v3149
    %v3151 = vpop.xlane.xlu0 %3150
    %vm3152 = vcmask 0
    %3153 = vst.msk [vmem:[#allocation8] sm:$0x1] %vm3152, %v3151
    // Predicated region
    $region22: #{_forward_impl.1} parent=1 // pred_check
      _
    $region23: #{_forward_impl.1} parent=1 // pred_check_branch
      %3155 = sbr.rel (0) target = $region25
    $region24: #{_forward_impl.1} parent=1 // pred_region
      %s3157 = ssub.s32 16, 16
      %3158 = vsyncadd [#allocation7], %s3157
      %s3160 = sshll.u32 [#allocation8], 4
      %s3161 = int_to_ptr.vmem [resolvable:$true] %s3160
      %3163 = dma.vmem_to_hbm [thread:$0]  %s3161, 16, %s6, [#allocation7]
    $region25: #{_forward_impl.1} parent=1 // pred_fallthru
      _
    // Predicated region
    $region26: #{_forward_impl.1} parent=1 // pred_check
      _
    $region27: #{_forward_impl.1} parent=1 // pred_check_branch
      %3165 = sbr.rel (0) target = $region29
    $region28: #{_forward_impl.1} parent=1 // pred_region
      %3166 = dma.done [#allocation7], 16
    $region29: #{_forward_impl.1} parent=1 // pred_fallthru
      _
    %3167 = vsyncpa [#allocation6], 1
    %3168 = vsyncpa [#allocation7], 1
  %3169 = vsyncmov [#allocation4]
  %s3170 = vpop.sfrf %3169
  %p3171 = scmp.eq.s32.totalorder %s3170, 0
  %p3172 = pneg %p3171
  %3174 = shalt.err (%p3172)
  %s3175 = scalar_lea.sflag [#allocation4], 1
  %3176 = vsyncmov %s3175
  %s3177 = vpop.sfrf %3176
  %p3178 = scmp.eq.s32.totalorder %s3177, 0
  %p3179 = pneg %p3178
  %3181 = shalt.err (%p3179)

</llo_original>
